<compile_context>
chip_gen: v7x
topology: tpu7x:2x2x1
jax: 0.10.0
libtpu: 0.0.40
codegen_flags: <defaults>
</compile_context>

<pallas_src>
import jax
import jax.numpy as jnp
from jax.experimental import pallas as pl
from jax.experimental.pallas import tpu as pltpu


# ------------------------------ Pallas kernels ------------------------------ #

def conv_relu_pool_kernel(p_ref, w_ref, b_ref, o_ref):
    """Fused 3x3 conv (as one stacked matmul) + 2x2 max-pool + bias + ReLU.

    p_ref: (1, K, 4*TM) bf16   im2col patches; lane q*TM+m is pool-member q of
                               pooled position m of this tile.
    w_ref: (Cout, K)    bf16   flattened conv weight (PyTorch OIHW order).
    b_ref: (Cout, 1)    f32    bias.
    o_ref: (1, Cout, TM) bf16  pooled activation (NCHW slab, M on lanes).
    """
    tm = o_ref.shape[2]
    y = jnp.dot(w_ref[...], p_ref[0],
                preferred_element_type=jnp.float32)              # (Cout, 4*TM) f32
    m0 = jnp.maximum(y[:, 0 * tm:1 * tm], y[:, 1 * tm:2 * tm])
    m1 = jnp.maximum(y[:, 2 * tm:3 * tm], y[:, 3 * tm:4 * tm])
    pooled = jnp.maximum(m0, m1)                                 # 2x2 max-pool
    # bias + ReLU hoisted after the pool max (mathematically identical)
    o_ref[0] = jnp.maximum(pooled + b_ref[...], 0.0).astype(o_ref.dtype)


def conv_relu_pool_linear_kernel(p_ref, w_ref, b_ref, wl_ref, bl_ref, o_ref):
    """conv3 + ReLU + pool + flatten(NCHW order) + lin1, fully fused.

    p_ref : (1, K, 4*M) bf16;  w_ref: (Cout, K) bf16;  b_ref: (Cout, 1) f32
    wl_ref: (Cout, M, O) bf16  linear weight regrouped per conv3 channel.
    bl_ref: (1, O) f32;        o_ref: (1, 1, O) f32
    """
    cout = w_ref.shape[0]
    m = wl_ref.shape[1]
    y = jnp.dot(w_ref[...], p_ref[0],
                preferred_element_type=jnp.float32)              # (Cout, 4*M) f32
    m0 = jnp.maximum(y[:, 0 * m:1 * m], y[:, 1 * m:2 * m])
    m1 = jnp.maximum(y[:, 2 * m:3 * m], y[:, 3 * m:4 * m])
    act = jnp.maximum(jnp.maximum(m0, m1) + b_ref[...], 0.0)     # (Cout, M) f32
    act = act.astype(jnp.bfloat16)
    wl = wl_ref[...]                                             # (Cout, M, O) bf16
    acc = bl_ref[...]                                            # (1, O) f32
    for c in range(cout):                                        # flatten + lin1
        acc = acc + jnp.dot(act[c:c + 1, :], wl[c],
                            preferred_element_type=jnp.float32)
    o_ref[0] = acc


# ------------------------------- JAX glue ----------------------------------- #

def _patches_pool_nchw(x_nchw):
    """3x3/stride-1/pad-1 im2col in NCHW, columns regrouped by 2x2 pool window.

    Returns (N, K, 4, M) bf16 with K = 9*Cin (k = ci*9 + dh*3 + dw, matching
    torch_weight.reshape(Cout, -1)), q = ph*2 + pw, m = oh*Wo + ow; plus Ho, Wo.
    """
    x = x_nchw.astype(jnp.bfloat16)
    N, C, H, W = x.shape
    xp = jnp.pad(x, ((0, 0), (0, 0), (1, 1), (1, 1)))
    slabs = jnp.stack([xp[:, :, dh:dh + H, dw:dw + W]
                       for dh in range(3) for dw in range(3)], axis=2)
    pat = slabs.reshape(N, C * 9, H, W)
    Ho, Wo = H // 2, W // 2
    pat = pat[:, :, :Ho * 2, :Wo * 2]              # PyTorch MaxPool2d floor mode
    pat = pat.reshape(N, C * 9, Ho, 2, Wo, 2).transpose(0, 1, 3, 5, 2, 4)
    return pat.reshape(N, C * 9, 4, Ho * Wo), Ho, Wo


def _pick_m_tile(m, max_tile=2048):
    """Largest lane-aligned M tile that keeps the per-step patch slab VMEM-friendly."""
    if m <= max_tile:
        return m
    for tm in range(max_tile, 127, -1):
        if m % tm == 0 and tm % 128 == 0:
            return tm
    return m                                       # no aligned divisor: one tile


def conv3x3_relu_maxpool2(x_nchw, w, b):
    """Conv2d(3x3, s=1, p=1) + ReLU + MaxPool2d(2,2) as one Pallas kernel.
    x_nchw: (N, Cin, H, W); w: (Cout, Cin, 3, 3); b: (Cout,).  Returns NCHW bf16."""
    N, Cin, H, W = x_nchw.shape
    Cout = w.shape[0]
    pat4, Ho, Wo = _patches_pool_nchw(x_nchw)      # (N, K, 4, M)
    M, K = Ho * Wo, 9 * Cin
    TM = _pick_m_tile(M)
    T = M // TM
    # group the 4 pool slabs of each M tile contiguously along the lane axis
    pat = (pat4.reshape(N, K, 4, T, TM).transpose(0, 1, 3, 2, 4)
               .reshape(N, K, T * 4 * TM))
    wm = w.reshape(Cout, K).astype(jnp.bfloat16)
    out = pl.pallas_call(
        conv_relu_pool_kernel,
        out_shape=jax.ShapeDtypeStruct((N, Cout, M), jnp.bfloat16),
        grid=(N, T),
        in_specs=[
            pl.BlockSpec((1, K, 4 * TM), lambda n, t: (n, 0, t)),
            pl.BlockSpec((Cout, K), lambda n, t: (0, 0)),
            pl.BlockSpec((Cout, 1), lambda n, t: (0, 0)),
        ],
        out_specs=pl.BlockSpec((1, Cout, TM), lambda n, t: (n, 0, t)),
        compiler_params=pltpu.CompilerParams(
            dimension_semantics=("parallel", "parallel")),
    )(pat, wm, b.reshape(Cout, 1))
    return out.reshape(N, Cout, Ho, Wo)


def conv3_pool_flatten_linear(x_nchw, w, b, wl, bl):
    """conv3 + ReLU + MaxPool + flatten + lin1, one fused Pallas kernel."""
    N, Cin, H, W = x_nchw.shape
    Cout = w.shape[0]
    O = wl.shape[0]
    pat4, Ho, Wo = _patches_pool_nchw(x_nchw)
    M, K = Ho * Wo, 9 * Cin
    pat = pat4.reshape(N, K, 4 * M)
    wm = w.reshape(Cout, K).astype(jnp.bfloat16)
    assert wl.shape[1] == Cout * M, "lin1 in_features mismatch with conv3 output"
    wlr = wl.reshape(O, Cout, M).transpose(1, 2, 0).astype(jnp.bfloat16)  # (Cout, M, O)
    out = pl.pallas_call(
        conv_relu_pool_linear_kernel,
        out_shape=jax.ShapeDtypeStruct((N, 1, O), jnp.float32),
        grid=(N,),
        in_specs=[
            pl.BlockSpec((1, K, 4 * M), lambda n: (n, 0, 0)),
            pl.BlockSpec((Cout, K), lambda n: (0, 0)),
            pl.BlockSpec((Cout, 1), lambda n: (0, 0)),
            pl.BlockSpec((Cout, M, O), lambda n: (0, 0, 0)),
            pl.BlockSpec((1, O), lambda n: (0, 0)),
        ],
        out_specs=pl.BlockSpec((1, 1, O), lambda n: (n, 0, 0)),
        compiler_params=pltpu.CompilerParams(dimension_semantics=("parallel",)),
    )(pat, wm, b.reshape(Cout, 1), wlr, bl.reshape(1, O))
    return out.reshape(N, O)


# ------------------------------- ConvModel ----------------------------------- #

def init_params(key, H, W):
    ks = jax.random.split(key, 8)

    def conv_p(kw, kb, cin, cout):
        w = jax.random.normal(kw, (cout, cin, 3, 3), jnp.float32) * 0.05
        b = jax.random.normal(kb, (cout,), jnp.float32) * 0.05
        return w, b

    w1, b1 = conv_p(ks[0], ks[1], 3, 32)
    w2, b2 = conv_p(ks[2], ks[3], 32, 32)
    w3, b3 = conv_p(ks[4], ks[5], 32, 16)
    feat = int(H * W * 16 / 64)                          # same formula as lin1
    wl = jax.random.normal(ks[6], (12, feat), jnp.float32) * 0.05
    bl = jax.random.normal(ks[7], (12,), jnp.float32) * 0.05
    return dict(w1=w1, b1=b1, w2=w2, b2=b2, w3=w3, b3=b3, wl=wl, bl=bl)


@jax.jit
def conv_model_forward(params, x_nchw):
    x = conv3x3_relu_maxpool2(x_nchw, params["w1"], params["b1"])
    x = conv3x3_relu_maxpool2(x, params["w2"], params["b2"])
    return conv3_pool_flatten_linear(x, params["w3"], params["b3"],
                                     params["wl"], params["bl"])


def reference_forward(params, x):
    """Pure-JAX/XLA reference with matmul inputs quantized to bf16 exactly like
    the kernels (bf16 x bf16 products are exact in f32 accumulation, so the
    comparison is tight and any large mismatch indicates a layout bug)."""
    def q(a):
        return a.astype(jnp.bfloat16).astype(jnp.float32)

    h = x
    for w, b in ((params["w1"], params["b1"]),
                 (params["w2"], params["b2"]),
                 (params["w3"], params["b3"])):
        y = jax.lax.conv_general_dilated(
            q(h), q(w), window_strides=(1, 1), padding=((1, 1), (1, 1)),
            dimension_numbers=("NCHW", "OIHW", "NCHW"))
        y = jnp.maximum(y + b[None, :, None, None], 0.0)
        n, c, hh, ww = y.shape
        y = y[:, :, :(hh // 2) * 2, :(ww // 2) * 2]
        h = y.reshape(n, c, hh // 2, 2, ww // 2, 2).max(axis=(3, 5))
    flat = h.reshape(h.shape[0], -1)
    return q(flat) @ q(params["wl"]).T + params["bl"]


if __name__ == "__main__":
    N, C, H, W = 2, 3, 16, 16                            # small, pool-divisible
    key = jax.random.PRNGKey(0)
    k_x, k_p = jax.random.split(key)
    x = jax.random.normal(k_x, (N, C, H, W), jnp.float32)
    params = init_params(k_p, H, W)

    out = conv_model_forward(params, x)
    jax.block_until_ready(out)
    assert out.shape == (N, 12) and out.dtype == jnp.float32

    ref = reference_forward(params, x)
    err = float(jnp.max(jnp.abs(out - ref)))
    assert err < 5e-3, f"max |pallas - ref| = {err}"
    print("KERNEL_OK")
</pallas_src>

<mosaic_0001>
module attributes {stable_mosaic.version = 11 : i64} {
  func.func @conv_relu_pool_kernel(%arg0: i32, %arg1: i32, %arg2: memref<1x27x256xbf16, #tpu.memory_space<vmem>>, %arg3: memref<32x27xbf16, #tpu.memory_space<vmem>>, %arg4: memref<32x1xf32, #tpu.memory_space<vmem>>, %arg5: memref<1x32x64xbf16, #tpu.memory_space<vmem>>) attributes {dimension_semantics = [#tpu.dimension_semantics<parallel>, #tpu.dimension_semantics<parallel>], iteration_bounds = array<i64: 2, 1>, scalar_prefetch = 0 : i64, scratch_operands = 0 : i64, tpu.core_type = #tpu.core_type<tc>, window_params = [{transform_indices = @transform_0, window_bounds = array<i64: 1, 27, 256>}, {pipeline_mode = #tpu.pipeline_mode<synchronous>, transform_indices = @transform_1, window_bounds = array<i64: 32, 27>}, {pipeline_mode = #tpu.pipeline_mode<synchronous>, transform_indices = @transform_2, window_bounds = array<i64: 32, 1>}, {transform_indices = @transform_3, window_bounds = array<i64: 1, 32, 64>}]} {
    %c0 = arith.constant 0 : index
    %c0_0 = arith.constant 0 : index
    %0 = vector.load %arg3[%c0, %c0_0] : memref<32x27xbf16, #tpu.memory_space<vmem>>, vector<32x27xbf16>
    %c0_1 = arith.constant 0 : index
    %c0_2 = arith.constant 0 : index
    %c0_3 = arith.constant 0 : index
    %1 = vector.load %arg2[%c0_1, %c0_2, %c0_3] : memref<1x27x256xbf16, #tpu.memory_space<vmem>>, vector<1x27x256xbf16>
    %2 = vector.shape_cast %1 : vector<1x27x256xbf16> to vector<27x256xbf16>
    %cst = arith.constant dense<0.000000e+00> : vector<32x256xf32>
    %3 = tpu.matmul %0, %2, %cst {dimension_numbers = #tpu.dot_dimension_numbers<[1], [0], [0], [1], [0, 0, 1, 1], [], []>} : vector<32x27xbf16>, vector<27x256xbf16>, vector<32x256xf32> -> vector<32x256xf32>
    %4 = vector.extract_strided_slice %3 {offsets = [0, 0], sizes = [32, 64], strides = [1, 1]} : vector<32x256xf32> to vector<32x64xf32>
    %5 = vector.extract_strided_slice %3 {offsets = [0, 64], sizes = [32, 64], strides = [1, 1]} : vector<32x256xf32> to vector<32x64xf32>
    %6 = arith.maximumf %4, %5 : vector<32x64xf32>
    %7 = vector.extract_strided_slice %3 {offsets = [0, 128], sizes = [32, 64], strides = [1, 1]} : vector<32x256xf32> to vector<32x64xf32>
    %8 = vector.extract_strided_slice %3 {offsets = [0, 192], sizes = [32, 64], strides = [1, 1]} : vector<32x256xf32> to vector<32x64xf32>
    %9 = arith.maximumf %7, %8 : vector<32x64xf32>
    %10 = arith.maximumf %6, %9 : vector<32x64xf32>
    %c0_4 = arith.constant 0 : index
    %c0_5 = arith.constant 0 : index
    %11 = vector.load %arg4[%c0_4, %c0_5] : memref<32x1xf32, #tpu.memory_space<vmem>>, vector<32x1xf32>
    %12 = vector.broadcast %11 : vector<32x1xf32> to vector<32x64xf32>
    %13 = arith.addf %10, %12 : vector<32x64xf32>
    %cst_6 = arith.constant 0.000000e+00 : f32
    %14 = vector.broadcast %cst_6 : f32 to vector<32x64xf32>
    %15 = arith.maximumf %13, %14 : vector<32x64xf32>
    %16 = arith.truncf %15 : vector<32x64xf32> to vector<32x64xbf16>
    %c0_7 = arith.constant 0 : index
    %c0_8 = arith.constant 0 : index
    %c0_9 = arith.constant 0 : index
    %17 = vector.load %arg5[%c0_7, %c0_8, %c0_9] : memref<1x32x64xbf16, #tpu.memory_space<vmem>>, vector<1x32x64xbf16>
    %18 = vector.shape_cast %17 : vector<1x32x64xbf16> to vector<32x64xbf16>
    %19 = vector.shape_cast %16 : vector<32x64xbf16> to vector<1x32x64xbf16>
    tpu.vector_store %arg5[%c0_7, %c0_8, %c0_9], %19 {strides = array<i32>} : memref<1x32x64xbf16, #tpu.memory_space<vmem>>, vector<1x32x64xbf16>,
    return
  }
  func.func @transform_0(%arg0: i32, %arg1: i32) -> (i32, i32, i32) {
    %c0_i32 = arith.constant 0 : i32
    %c0_i32_0 = arith.constant 0 : i32
    return %arg0, %c0_i32, %arg1 : i32, i32, i32
  }
  func.func @transform_1(%arg0: i32, %arg1: i32) -> (i32, i32) {
    %c0_i32 = arith.constant 0 : i32
    %c0_i32_0 = arith.constant 0 : i32
    %c0_i32_1 = arith.constant 0 : i32
    return %c0_i32, %c0_i32_0 : i32, i32
  }
  func.func @transform_2(%arg0: i32, %arg1: i32) -> (i32, i32) {
    %c0_i32 = arith.constant 0 : i32
    %c0_i32_0 = arith.constant 0 : i32
    %c0_i32_1 = arith.constant 0 : i32
    return %c0_i32, %c0_i32_0 : i32, i32
  }
  func.func @transform_3(%arg0: i32, %arg1: i32) -> (i32, i32, i32) {
    %c0_i32 = arith.constant 0 : i32
    %c0_i32_0 = arith.constant 0 : i32
    return %arg0, %c0_i32, %arg1 : i32, i32, i32
  }
}

module attributes {stable_mosaic.version = 11 : i64} {
  func.func @conv_relu_pool_kernel(%arg0: i32, %arg1: i32, %arg2: memref<1x288x64xbf16, #tpu.memory_space<vmem>>, %arg3: memref<32x288xbf16, #tpu.memory_space<vmem>>, %arg4: memref<32x1xf32, #tpu.memory_space<vmem>>, %arg5: memref<1x32x16xbf16, #tpu.memory_space<vmem>>) attributes {dimension_semantics = [#tpu.dimension_semantics<parallel>, #tpu.dimension_semantics<parallel>], iteration_bounds = array<i64: 2, 1>, scalar_prefetch = 0 : i64, scratch_operands = 0 : i64, tpu.core_type = #tpu.core_type<tc>, window_params = [{transform_indices = @transform_0, window_bounds = array<i64: 1, 288, 64>}, {pipeline_mode = #tpu.pipeline_mode<synchronous>, transform_indices = @transform_1, window_bounds = array<i64: 32, 288>}, {pipeline_mode = #tpu.pipeline_mode<synchronous>, transform_indices = @transform_2, window_bounds = array<i64: 32, 1>}, {transform_indices = @transform_3, window_bounds = array<i64: 1, 32, 16>}]} {
    %c0 = arith.constant 0 : index
    %c0_0 = arith.constant 0 : index
    %0 = vector.load %arg3[%c0, %c0_0] : memref<32x288xbf16, #tpu.memory_space<vmem>>, vector<32x288xbf16>
    %c0_1 = arith.constant 0 : index
    %c0_2 = arith.constant 0 : index
    %c0_3 = arith.constant 0 : index
    %1 = vector.load %arg2[%c0_1, %c0_2, %c0_3] : memref<1x288x64xbf16, #tpu.memory_space<vmem>>, vector<1x288x64xbf16>
    %2 = vector.shape_cast %1 : vector<1x288x64xbf16> to vector<288x64xbf16>
    %cst = arith.constant dense<0.000000e+00> : vector<32x64xf32>
    %3 = tpu.matmul %0, %2, %cst {dimension_numbers = #tpu.dot_dimension_numbers<[1], [0], [0], [1], [0, 0, 1, 1], [], []>} : vector<32x288xbf16>, vector<288x64xbf16>, vector<32x64xf32> -> vector<32x64xf32>
    %4 = vector.extract_strided_slice %3 {offsets = [0, 0], sizes = [32, 16], strides = [1, 1]} : vector<32x64xf32> to vector<32x16xf32>
    %5 = vector.extract_strided_slice %3 {offsets = [0, 16], sizes = [32, 16], strides = [1, 1]} : vector<32x64xf32> to vector<32x16xf32>
    %6 = arith.maximumf %4, %5 : vector<32x16xf32>
    %7 = vector.extract_strided_slice %3 {offsets = [0, 32], sizes = [32, 16], strides = [1, 1]} : vector<32x64xf32> to vector<32x16xf32>
    %8 = vector.extract_strided_slice %3 {offsets = [0, 48], sizes = [32, 16], strides = [1, 1]} : vector<32x64xf32> to vector<32x16xf32>
    %9 = arith.maximumf %7, %8 : vector<32x16xf32>
    %10 = arith.maximumf %6, %9 : vector<32x16xf32>
    %c0_4 = arith.constant 0 : index
    %c0_5 = arith.constant 0 : index
    %11 = vector.load %arg4[%c0_4, %c0_5] : memref<32x1xf32, #tpu.memory_space<vmem>>, vector<32x1xf32>
    %12 = vector.broadcast %11 : vector<32x1xf32> to vector<32x16xf32>
    %13 = arith.addf %10, %12 : vector<32x16xf32>
    %cst_6 = arith.constant 0.000000e+00 : f32
    %14 = vector.broadcast %cst_6 : f32 to vector<32x16xf32>
    %15 = arith.maximumf %13, %14 : vector<32x16xf32>
    %16 = arith.truncf %15 : vector<32x16xf32> to vector<32x16xbf16>
    %c0_7 = arith.constant 0 : index
    %c0_8 = arith.constant 0 : index
    %c0_9 = arith.constant 0 : index
    %17 = vector.load %arg5[%c0_7, %c0_8, %c0_9] : memref<1x32x16xbf16, #tpu.memory_space<vmem>>, vector<1x32x16xbf16>
    %18 = vector.shape_cast %17 : vector<1x32x16xbf16> to vector<32x16xbf16>
    %19 = vector.shape_cast %16 : vector<32x16xbf16> to vector<1x32x16xbf16>
    tpu.vector_store %arg5[%c0_7, %c0_8, %c0_9], %19 {strides = array<i32>} : memref<1x32x16xbf16, #tpu.memory_space<vmem>>, vector<1x32x16xbf16>,
    return
  }
  func.func @transform_0(%arg0: i32, %arg1: i32) -> (i32, i32, i32) {
    %c0_i32 = arith.constant 0 : i32
    %c0_i32_0 = arith.constant 0 : i32
    return %arg0, %c0_i32, %arg1 : i32, i32, i32
  }
  func.func @transform_1(%arg0: i32, %arg1: i32) -> (i32, i32) {
    %c0_i32 = arith.constant 0 : i32
    %c0_i32_0 = arith.constant 0 : i32
    %c0_i32_1 = arith.constant 0 : i32
    return %c0_i32, %c0_i32_0 : i32, i32
  }
  func.func @transform_2(%arg0: i32, %arg1: i32) -> (i32, i32) {
    %c0_i32 = arith.constant 0 : i32
    %c0_i32_0 = arith.constant 0 : i32
    %c0_i32_1 = arith.constant 0 : i32
    return %c0_i32, %c0_i32_0 : i32, i32
  }
  func.func @transform_3(%arg0: i32, %arg1: i32) -> (i32, i32, i32) {
    %c0_i32 = arith.constant 0 : i32
    %c0_i32_0 = arith.constant 0 : i32
    return %arg0, %c0_i32, %arg1 : i32, i32, i32
  }
}

module attributes {stable_mosaic.version = 11 : i64} {
  func.func @conv_relu_pool_linear_kernel(%arg0: i32, %arg1: memref<1x288x16xbf16, #tpu.memory_space<vmem>>, %arg2: memref<16x288xbf16, #tpu.memory_space<vmem>>, %arg3: memref<16x1xf32, #tpu.memory_space<vmem>>, %arg4: memref<16x4x12xbf16, #tpu.memory_space<vmem>>, %arg5: memref<1x12xf32, #tpu.memory_space<vmem>>, %arg6: memref<1x1x12xf32, #tpu.memory_space<vmem>>) attributes {dimension_semantics = [#tpu.dimension_semantics<parallel>], iteration_bounds = array<i64: 2>, scalar_prefetch = 0 : i64, scratch_operands = 0 : i64, tpu.core_type = #tpu.core_type<tc>, window_params = [{transform_indices = @transform_0, window_bounds = array<i64: 1, 288, 16>}, {pipeline_mode = #tpu.pipeline_mode<synchronous>, transform_indices = @transform_1, window_bounds = array<i64: 16, 288>}, {pipeline_mode = #tpu.pipeline_mode<synchronous>, transform_indices = @transform_2, window_bounds = array<i64: 16, 1>}, {pipeline_mode = #tpu.pipeline_mode<synchronous>, transform_indices = @transform_3, window_bounds = array<i64: 16, 4, 12>}, {pipeline_mode = #tpu.pipeline_mode<synchronous>, transform_indices = @transform_4, window_bounds = array<i64: 1, 12>}, {transform_indices = @transform_5, window_bounds = array<i64: 1, 1, 12>}]} {
    %c0 = arith.constant 0 : index
    %c0_0 = arith.constant 0 : index
    %0 = vector.load %arg2[%c0, %c0_0] : memref<16x288xbf16, #tpu.memory_space<vmem>>, vector<16x288xbf16>
    %c0_1 = arith.constant 0 : index
    %c0_2 = arith.constant 0 : index
    %c0_3 = arith.constant 0 : index
    %1 = vector.load %arg1[%c0_1, %c0_2, %c0_3] : memref<1x288x16xbf16, #tpu.memory_space<vmem>>, vector<1x288x16xbf16>
    %2 = vector.shape_cast %1 : vector<1x288x16xbf16> to vector<288x16xbf16>
    %cst = arith.constant dense<0.000000e+00> : vector<16x16xf32>
    %3 = tpu.matmul %0, %2, %cst {dimension_numbers = #tpu.dot_dimension_numbers<[1], [0], [0], [1], [0, 0, 1, 1], [], []>} : vector<16x288xbf16>, vector<288x16xbf16>, vector<16x16xf32> -> vector<16x16xf32>
    %4 = vector.extract_strided_slice %3 {offsets = [0, 0], sizes = [16, 4], strides = [1, 1]} : vector<16x16xf32> to vector<16x4xf32>
    %5 = vector.extract_strided_slice %3 {offsets = [0, 4], sizes = [16, 4], strides = [1, 1]} : vector<16x16xf32> to vector<16x4xf32>
    %6 = arith.maximumf %4, %5 : vector<16x4xf32>
    %7 = vector.extract_strided_slice %3 {offsets = [0, 8], sizes = [16, 4], strides = [1, 1]} : vector<16x16xf32> to vector<16x4xf32>
    %8 = vector.extract_strided_slice %3 {offsets = [0, 12], sizes = [16, 4], strides = [1, 1]} : vector<16x16xf32> to vector<16x4xf32>
    %9 = arith.maximumf %7, %8 : vector<16x4xf32>
    %10 = arith.maximumf %6, %9 : vector<16x4xf32>
    %c0_4 = arith.constant 0 : index
    %c0_5 = arith.constant 0 : index
    %11 = vector.load %arg3[%c0_4, %c0_5] : memref<16x1xf32, #tpu.memory_space<vmem>>, vector<16x1xf32>
    %12 = vector.broadcast %11 : vector<16x1xf32> to vector<16x4xf32>
    %13 = arith.addf %10, %12 : vector<16x4xf32>
    %cst_6 = arith.constant 0.000000e+00 : f32
    %14 = vector.broadcast %cst_6 : f32 to vector<16x4xf32>
    %15 = arith.maximumf %13, %14 : vector<16x4xf32>
    %16 = arith.truncf %15 : vector<16x4xf32> to vector<16x4xbf16>
    %c0_7 = arith.constant 0 : index
    %c0_8 = arith.constant 0 : index
    %c0_9 = arith.constant 0 : index
    %17 = vector.load %arg4[%c0_7, %c0_8, %c0_9] : memref<16x4x12xbf16, #tpu.memory_space<vmem>>, vector<16x4x12xbf16>
    %c0_10 = arith.constant 0 : index
    %c0_11 = arith.constant 0 : index
    %18 = vector.load %arg5[%c0_10, %c0_11] : memref<1x12xf32, #tpu.memory_space<vmem>>, vector<1x12xf32>
    %19 = vector.extract_strided_slice %16 {offsets = [0, 0], sizes = [1, 4], strides = [1, 1]} : vector<16x4xbf16> to vector<1x4xbf16>
    %20 = vector.extract_strided_slice %17 {offsets = [0, 0, 0], sizes = [1, 4, 12], strides = [1, 1, 1]} : vector<16x4x12xbf16> to vector<1x4x12xbf16>
    %21 = vector.shape_cast %20 : vector<1x4x12xbf16> to vector<4x12xbf16>
    %cst_12 = arith.constant dense<0.000000e+00> : vector<1x12xf32>
    %22 = tpu.matmul %19, %21, %cst_12 {dimension_numbers = #tpu.dot_dimension_numbers<[1], [0], [0], [1], [0, 0, 1, 1], [], []>} : vector<1x4xbf16>, vector<4x12xbf16>, vector<1x12xf32> -> vector<1x12xf32>
    %23 = arith.addf %18, %22 : vector<1x12xf32>
    %24 = vector.extract_strided_slice %16 {offsets = [1, 0], sizes = [1, 4], strides = [1, 1]} : vector<16x4xbf16> to vector<1x4xbf16>
    %25 = vector.extract_strided_slice %17 {offsets = [1, 0, 0], sizes = [1, 4, 12], strides = [1, 1, 1]} : vector<16x4x12xbf16> to vector<1x4x12xbf16>
    %26 = vector.shape_cast %25 : vector<1x4x12xbf16> to vector<4x12xbf16>
    %cst_13 = arith.constant dense<0.000000e+00> : vector<1x12xf32>
    %27 = tpu.matmul %24, %26, %cst_13 {dimension_numbers = #tpu.dot_dimension_numbers<[1], [0], [0], [1], [0, 0, 1, 1], [], []>} : vector<1x4xbf16>, vector<4x12xbf16>, vector<1x12xf32> -> vector<1x12xf32>
    %28 = arith.addf %23, %27 : vector<1x12xf32>
    %29 = vector.extract_strided_slice %16 {offsets = [2, 0], sizes = [1, 4], strides = [1, 1]} : vector<16x4xbf16> to vector<1x4xbf16>
    %30 = vector.extract_strided_slice %17 {offsets = [2, 0, 0], sizes = [1, 4, 12], strides = [1, 1, 1]} : vector<16x4x12xbf16> to vector<1x4x12xbf16>
    %31 = vector.shape_cast %30 : vector<1x4x12xbf16> to vector<4x12xbf16>
    %cst_14 = arith.constant dense<0.000000e+00> : vector<1x12xf32>
    %32 = tpu.matmul %29, %31, %cst_14 {dimension_numbers = #tpu.dot_dimension_numbers<[1], [0], [0], [1], [0, 0, 1, 1], [], []>} : vector<1x4xbf16>, vector<4x12xbf16>, vector<1x12xf32> -> vector<1x12xf32>
    %33 = arith.addf %28, %32 : vector<1x12xf32>
    %34 = vector.extract_strided_slice %16 {offsets = [3, 0], sizes = [1, 4], strides = [1, 1]} : vector<16x4xbf16> to vector<1x4xbf16>
    %35 = vector.extract_strided_slice %17 {offsets = [3, 0, 0], sizes = [1, 4, 12], strides = [1, 1, 1]} : vector<16x4x12xbf16> to vector<1x4x12xbf16>
    %36 = vector.shape_cast %35 : vector<1x4x12xbf16> to vector<4x12xbf16>
    %cst_15 = arith.constant dense<0.000000e+00> : vector<1x12xf32>
    %37 = tpu.matmul %34, %36, %cst_15 {dimension_numbers = #tpu.dot_dimension_numbers<[1], [0], [0], [1], [0, 0, 1, 1], [], []>} : vector<1x4xbf16>, vector<4x12xbf16>, vector<1x12xf32> -> vector<1x12xf32>
    %38 = arith.addf %33, %37 : vector<1x12xf32>
    %39 = vector.extract_strided_slice %16 {offsets = [4, 0], sizes = [1, 4], strides = [1, 1]} : vector<16x4xbf16> to vector<1x4xbf16>
    %40 = vector.extract_strided_slice %17 {offsets = [4, 0, 0], sizes = [1, 4, 12], strides = [1, 1, 1]} : vector<16x4x12xbf16> to vector<1x4x12xbf16>
    %41 = vector.shape_cast %40 : vector<1x4x12xbf16> to vector<4x12xbf16>
    %cst_16 = arith.constant dense<0.000000e+00> : vector<1x12xf32>
    %42 = tpu.matmul %39, %41, %cst_16 {dimension_numbers = #tpu.dot_dimension_numbers<[1], [0], [0], [1], [0, 0, 1, 1], [], []>} : vector<1x4xbf16>, vector<4x12xbf16>, vector<1x12xf32> -> vector<1x12xf32>
    %43 = arith.addf %38, %42 : vector<1x12xf32>
    %44 = vector.extract_strided_slice %16 {offsets = [5, 0], sizes = [1, 4], strides = [1, 1]} : vector<16x4xbf16> to vector<1x4xbf16>
    %45 = vector.extract_strided_slice %17 {offsets = [5, 0, 0], sizes = [1, 4, 12], strides = [1, 1, 1]} : vector<16x4x12xbf16> to vector<1x4x12xbf16>
    %46 = vector.shape_cast %45 : vector<1x4x12xbf16> to vector<4x12xbf16>
    %cst_17 = arith.constant dense<0.000000e+00> : vector<1x12xf32>
    %47 = tpu.matmul %44, %46, %cst_17 {dimension_numbers = #tpu.dot_dimension_numbers<[1], [0], [0], [1], [0, 0, 1, 1], [], []>} : vector<1x4xbf16>, vector<4x12xbf16>, vector<1x12xf32> -> vector<1x12xf32>
    %48 = arith.addf %43, %47 : vector<1x12xf32>
    %49 = vector.extract_strided_slice %16 {offsets = [6, 0], sizes = [1, 4], strides = [1, 1]} : vector<16x4xbf16> to vector<1x4xbf16>
    %50 = vector.extract_strided_slice %17 {offsets = [6, 0, 0], sizes = [1, 4, 12], strides = [1, 1, 1]} : vector<16x4x12xbf16> to vector<1x4x12xbf16>
    %51 = vector.shape_cast %50 : vector<1x4x12xbf16> to vector<4x12xbf16>
    %cst_18 = arith.constant dense<0.000000e+00> : vector<1x12xf32>
    %52 = tpu.matmul %49, %51, %cst_18 {dimension_numbers = #tpu.dot_dimension_numbers<[1], [0], [0], [1], [0, 0, 1, 1], [], []>} : vector<1x4xbf16>, vector<4x12xbf16>, vector<1x12xf32> -> vector<1x12xf32>
    %53 = arith.addf %48, %52 : vector<1x12xf32>
    %54 = vector.extract_strided_slice %16 {offsets = [7, 0], sizes = [1, 4], strides = [1, 1]} : vector<16x4xbf16> to vector<1x4xbf16>
    %55 = vector.extract_strided_slice %17 {offsets = [7, 0, 0], sizes = [1, 4, 12], strides = [1, 1, 1]} : vector<16x4x12xbf16> to vector<1x4x12xbf16>
    %56 = vector.shape_cast %55 : vector<1x4x12xbf16> to vector<4x12xbf16>
    %cst_19 = arith.constant dense<0.000000e+00> : vector<1x12xf32>
    %57 = tpu.matmul %54, %56, %cst_19 {dimension_numbers = #tpu.dot_dimension_numbers<[1], [0], [0], [1], [0, 0, 1, 1], [], []>} : vector<1x4xbf16>, vector<4x12xbf16>, vector<1x12xf32> -> vector<1x12xf32>
    %58 = arith.addf %53, %57 : vector<1x12xf32>
    %59 = vector.extract_strided_slice %16 {offsets = [8, 0], sizes = [1, 4], strides = [1, 1]} : vector<16x4xbf16> to vector<1x4xbf16>
    %60 = vector.extract_strided_slice %17 {offsets = [8, 0, 0], sizes = [1, 4, 12], strides = [1, 1, 1]} : vector<16x4x12xbf16> to vector<1x4x12xbf16>
    %61 = vector.shape_cast %60 : vector<1x4x12xbf16> to vector<4x12xbf16>
    %cst_20 = arith.constant dense<0.000000e+00> : vector<1x12xf32>
    %62 = tpu.matmul %59, %61, %cst_20 {dimension_numbers = #tpu.dot_dimension_numbers<[1], [0], [0], [1], [0, 0, 1, 1], [], []>} : vector<1x4xbf16>, vector<4x12xbf16>, vector<1x12xf32> -> vector<1x12xf32>
    %63 = arith.addf %58, %62 : vector<1x12xf32>
    %64 = vector.extract_strided_slice %16 {offsets = [9, 0], sizes = [1, 4], strides = [1, 1]} : vector<16x4xbf16> to vector<1x4xbf16>
    %65 = vector.extract_strided_slice %17 {offsets = [9, 0, 0], sizes = [1, 4, 12], strides = [1, 1, 1]} : vector<16x4x12xbf16> to vector<1x4x12xbf16>
    %66 = vector.shape_cast %65 : vector<1x4x12xbf16> to vector<4x12xbf16>
    %cst_21 = arith.constant dense<0.000000e+00> : vector<1x12xf32>
    %67 = tpu.matmul %64, %66, %cst_21 {dimension_numbers = #tpu.dot_dimension_numbers<[1], [0], [0], [1], [0, 0, 1, 1], [], []>} : vector<1x4xbf16>, vector<4x12xbf16>, vector<1x12xf32> -> vector<1x12xf32>
    %68 = arith.addf %63, %67 : vector<1x12xf32>
    %69 = vector.extract_strided_slice %16 {offsets = [10, 0], sizes = [1, 4], strides = [1, 1]} : vector<16x4xbf16> to vector<1x4xbf16>
    %70 = vector.extract_strided_slice %17 {offsets = [10, 0, 0], sizes = [1, 4, 12], strides = [1, 1, 1]} : vector<16x4x12xbf16> to vector<1x4x12xbf16>
    %71 = vector.shape_cast %70 : vector<1x4x12xbf16> to vector<4x12xbf16>
    %cst_22 = arith.constant dense<0.000000e+00> : vector<1x12xf32>
    %72 = tpu.matmul %69, %71, %cst_22 {dimension_numbers = #tpu.dot_dimension_numbers<[1], [0], [0], [1], [0, 0, 1, 1], [], []>} : vector<1x4xbf16>, vector<4x12xbf16>, vector<1x12xf32> -> vector<1x12xf32>
    %73 = arith.addf %68, %72 : vector<1x12xf32>
    %74 = vector.extract_strided_slice %16 {offsets = [11, 0], sizes = [1, 4], strides = [1, 1]} : vector<16x4xbf16> to vector<1x4xbf16>
    %75 = vector.extract_strided_slice %17 {offsets = [11, 0, 0], sizes = [1, 4, 12], strides = [1, 1, 1]} : vector<16x4x12xbf16> to vector<1x4x12xbf16>
    %76 = vector.shape_cast %75 : vector<1x4x12xbf16> to vector<4x12xbf16>
    %cst_23 = arith.constant dense<0.000000e+00> : vector<1x12xf32>
    %77 = tpu.matmul %74, %76, %cst_23 {dimension_numbers = #tpu.dot_dimension_numbers<[1], [0], [0], [1], [0, 0, 1, 1], [], []>} : vector<1x4xbf16>, vector<4x12xbf16>, vector<1x12xf32> -> vector<1x12xf32>
    %78 = arith.addf %73, %77 : vector<1x12xf32>
    %79 = vector.extract_strided_slice %16 {offsets = [12, 0], sizes = [1, 4], strides = [1, 1]} : vector<16x4xbf16> to vector<1x4xbf16>
    %80 = vector.extract_strided_slice %17 {offsets = [12, 0, 0], sizes = [1, 4, 12], strides = [1, 1, 1]} : vector<16x4x12xbf16> to vector<1x4x12xbf16>
    %81 = vector.shape_cast %80 : vector<1x4x12xbf16> to vector<4x12xbf16>
    %cst_24 = arith.constant dense<0.000000e+00> : vector<1x12xf32>
    %82 = tpu.matmul %79, %81, %cst_24 {dimension_numbers = #tpu.dot_dimension_numbers<[1], [0], [0], [1], [0, 0, 1, 1], [], []>} : vector<1x4xbf16>, vector<4x12xbf16>, vector<1x12xf32> -> vector<1x12xf32>
    %83 = arith.addf %78, %82 : vector<1x12xf32>
    %84 = vector.extract_strided_slice %16 {offsets = [13, 0], sizes = [1, 4], strides = [1, 1]} : vector<16x4xbf16> to vector<1x4xbf16>
    %85 = vector.extract_strided_slice %17 {offsets = [13, 0, 0], sizes = [1, 4, 12], strides = [1, 1, 1]} : vector<16x4x12xbf16> to vector<1x4x12xbf16>
    %86 = vector.shape_cast %85 : vector<1x4x12xbf16> to vector<4x12xbf16>
    %cst_25 = arith.constant dense<0.000000e+00> : vector<1x12xf32>
    %87 = tpu.matmul %84, %86, %cst_25 {dimension_numbers = #tpu.dot_dimension_numbers<[1], [0], [0], [1], [0, 0, 1, 1], [], []>} : vector<1x4xbf16>, vector<4x12xbf16>, vector<1x12xf32> -> vector<1x12xf32>
    %88 = arith.addf %83, %87 : vector<1x12xf32>
    %89 = vector.extract_strided_slice %16 {offsets = [14, 0], sizes = [1, 4], strides = [1, 1]} : vector<16x4xbf16> to vector<1x4xbf16>
    %90 = vector.extract_strided_slice %17 {offsets = [14, 0, 0], sizes = [1, 4, 12], strides = [1, 1, 1]} : vector<16x4x12xbf16> to vector<1x4x12xbf16>
    %91 = vector.shape_cast %90 : vector<1x4x12xbf16> to vector<4x12xbf16>
    %cst_26 = arith.constant dense<0.000000e+00> : vector<1x12xf32>
    %92 = tpu.matmul %89, %91, %cst_26 {dimension_numbers = #tpu.dot_dimension_numbers<[1], [0], [0], [1], [0, 0, 1, 1], [], []>} : vector<1x4xbf16>, vector<4x12xbf16>, vector<1x12xf32> -> vector<1x12xf32>
    %93 = arith.addf %88, %92 : vector<1x12xf32>
    %94 = vector.extract_strided_slice %16 {offsets = [15, 0], sizes = [1, 4], strides = [1, 1]} : vector<16x4xbf16> to vector<1x4xbf16>
    %95 = vector.extract_strided_slice %17 {offsets = [15, 0, 0], sizes = [1, 4, 12], strides = [1, 1, 1]} : vector<16x4x12xbf16> to vector<1x4x12xbf16>
    %96 = vector.shape_cast %95 : vector<1x4x12xbf16> to vector<4x12xbf16>
    %cst_27 = arith.constant dense<0.000000e+00> : vector<1x12xf32>
    %97 = tpu.matmul %94, %96, %cst_27 {dimension_numbers = #tpu.dot_dimension_numbers<[1], [0], [0], [1], [0, 0, 1, 1], [], []>} : vector<1x4xbf16>, vector<4x12xbf16>, vector<1x12xf32> -> vector<1x12xf32>
    %98 = arith.addf %93, %97 : vector<1x12xf32>
    %c0_28 = arith.constant 0 : index
    %c0_29 = arith.constant 0 : index
    %c0_30 = arith.constant 0 : index
    %99 = vector.load %arg6[%c0_28, %c0_29, %c0_30] : memref<1x1x12xf32, #tpu.memory_space<vmem>>, vector<1x1x12xf32>
    %100 = vector.shape_cast %99 : vector<1x1x12xf32> to vector<1x12xf32>
    %101 = vector.shape_cast %98 : vector<1x12xf32> to vector<1x1x12xf32>
    tpu.vector_store %arg6[%c0_28, %c0_29, %c0_30], %101 {strides = array<i32>} : memref<1x1x12xf32, #tpu.memory_space<vmem>>, vector<1x1x12xf32>,
    return
  }
  func.func @transform_0(%arg0: i32) -> (i32, i32, i32) {
    %c0_i32 = arith.constant 0 : i32
    %c0_i32_0 = arith.constant 0 : i32
    %c0_i32_1 = arith.constant 0 : i32
    return %arg0, %c0_i32, %c0_i32_0 : i32, i32, i32
  }
  func.func @transform_1(%arg0: i32) -> (i32, i32) {
    %c0_i32 = arith.constant 0 : i32
    %c0_i32_0 = arith.constant 0 : i32
    %c0_i32_1 = arith.constant 0 : i32
    return %c0_i32, %c0_i32_0 : i32, i32
  }
  func.func @transform_2(%arg0: i32) -> (i32, i32) {
    %c0_i32 = arith.constant 0 : i32
    %c0_i32_0 = arith.constant 0 : i32
    %c0_i32_1 = arith.constant 0 : i32
    return %c0_i32, %c0_i32_0 : i32, i32
  }
  func.func @transform_3(%arg0: i32) -> (i32, i32, i32) {
    %c0_i32 = arith.constant 0 : i32
    %c0_i32_0 = arith.constant 0 : i32
    %c0_i32_1 = arith.constant 0 : i32
    %c0_i32_2 = arith.constant 0 : i32
    return %c0_i32, %c0_i32_0, %c0_i32_1 : i32, i32, i32
  }
  func.func @transform_4(%arg0: i32) -> (i32, i32) {
    %c0_i32 = arith.constant 0 : i32
    %c0_i32_0 = arith.constant 0 : i32
    %c0_i32_1 = arith.constant 0 : i32
    return %c0_i32, %c0_i32_0 : i32, i32
  }
  func.func @transform_5(%arg0: i32) -> (i32, i32, i32) {
    %c0_i32 = arith.constant 0 : i32
    %c0_i32_0 = arith.constant 0 : i32
    %c0_i32_1 = arith.constant 0 : i32
    return %arg0, %c0_i32, %c0_i32_0 : i32, i32, i32
  }
}

</mosaic_0001>

<llo_original>
// kernel: conv_model_forward.3
$region0: #{conv_model_forward.3}
  #allocation0 [shape = 'u32[]', space=smem, size = 0x4, offset = 0x4, fixed_abs, tag = 'smem constant byte address 0x4 - core index']
  #allocation1 [shape = 'u32[144,128]{1,0:T(1,128)}', space=vmem, size = 0x12000, scoped, tag = 'internal scratch']
  %s0 = inlined_call_operand.vmem [shape: bf16[2,27,256], index: 0, kind: input, shape index: {}]
  %s1 = inlined_call_operand.vmem [shape: bf16[32,27], index: 1, kind: input, shape index: {}]
  %s2 = inlined_call_operand.vmem [shape: f32[32,1], index: 2, kind: input, shape index: {}]
  %s3 = inlined_call_operand.vmem [shape: bf16[2,32,64], index: 3, kind: output, shape index: {}]
  %s4 = sld [smem:[#allocation0]]
  $region45: #{conv_model_forward.3} parent=0
    _
  %s6 = ssub.s32 1, %s4
  %s7 = scalar_select 0, %s6, %s4
  loop: start=0, step=1, limit=4
  $region2: #{conv_model_forward.3} parent=0 // loop_pre_header
    _
  $region3: #{conv_model_forward.3} parent=0 // loop_header
    %s9 = sphi 0, %s13
    %p10 = scmp.ge.s32.totalorder %s9, 4
    %s16 = sphi 0, %s28
    %s17 = sphi 0, %s24
    %s18 = sphi 0, %s16
    %s19 = sphi 0, %s17
    %s20 = sphi 0, %s18
    %s21 = sphi 0, %s19
    %s33 = sphi 0, %s35
    %s36 = sphi 0, %s33
    %s37 = sphi 0, %s36
    %s53 = sphi 0, %s37
    %s57 = sphi 0, %s57
    %s59 = sphi 0, %s57
    %s60 = sphi 0, %s59
    %s74 = sphi 0, %s60
    %s78 = sphi 0, %s78
    %s80 = sphi 0, %s78
    %s81 = sphi 0, %s80
    %s95 = sphi 0, %s81
    %s103 = sphi 0, %s105
    %s106 = sphi 0, %s103
    %s107 = sphi 0, %s106
    %s123 = sphi 0, %s107
  $region4: #{conv_model_forward.3} parent=0 // loop_header_branch
    %12 = sbr.rel (%p10) target = $region8
  $region5: #{conv_model_forward.3} parent=0 // loop_body
    %s14 = ssub.s32 %s9, 1
    %s15 = ssub.s32 %s9, 2
    %s22 = sadd.s32 1, %s17
    %p23 = scmp.ge.s32.totalorder %s22, 1
    %s24 = scalar_select %p23, 0, %s22
    %s25 = sadd.s32 1, %s16
    %s26 = scalar_select %p23, %s25, %s16
    %p27 = scmp.ge.s32.totalorder %s26, 2
    %s28 = scalar_select %p27, 0, %s26
    %s29 = ssub.s32 %s16, %s28
    %s30 = ssub.s32 %s17, %s24
    %s31 = sor.u32 %s29, %s30
    %p32 = scmp.eq.s32.totalorder %s31, 0
    %s34 = sadd.s32 %s33, 1
    %s35 = scalar_select %p32, %s33, %s34
    %p38 = pneg %p32
    %p39 = scmp.eq.s32.totalorder %s9, 1
    %p40 = por %p38, %p39
    %p41 = scmp.ne.s32.totalorder %s33, %s36
    %p42 = scmp.eq.s32.totalorder %s9, 0
    %p43 = por %p41, %p42
    %p44 = scmp.ne.s32.totalorder %s33, %s36
    %p45 = scmp.eq.s32.totalorder %s14, 1
    %p46 = por %p44, %p45
    %p47 = scmp.ne.s32.totalorder %s36, %s37
    %p48 = scmp.eq.s32.totalorder %s14, 0
    %p49 = por %p47, %p48
    %p50 = scmp.ne.s32.totalorder %s36, %s37
    %p51 = scmp.eq.s32.totalorder %s15, 1
    %p52 = por %p50, %p51
    %p54 = scmp.ne.s32.totalorder %s37, %s53
    %p55 = scmp.eq.s32.totalorder %s15, 0
    %p56 = por %p54, %p55
    %s58 = sadd.s32 %s57, 1
    %p61 = scmp.eq.s32.totalorder %s9, 1
    %p62 = scmp.ne.s32.totalorder %s57, %s59
    %p63 = scmp.eq.s32.totalorder %s9, 0
    %p64 = por %p62, %p63
    %p65 = scmp.ne.s32.totalorder %s57, %s59
    %p66 = scmp.eq.s32.totalorder %s14, 1
    %p67 = por %p65, %p66
    %p68 = scmp.ne.s32.totalorder %s59, %s60
    %p69 = scmp.eq.s32.totalorder %s14, 0
    %p70 = por %p68, %p69
    %p71 = scmp.ne.s32.totalorder %s59, %s60
    %p72 = scmp.eq.s32.totalorder %s15, 1
    %p73 = por %p71, %p72
    %p75 = scmp.ne.s32.totalorder %s60, %s74
    %p76 = scmp.eq.s32.totalorder %s15, 0
    %p77 = por %p75, %p76
    %s79 = sadd.s32 %s78, 1
    %p82 = scmp.eq.s32.totalorder %s9, 1
    %p83 = scmp.ne.s32.totalorder %s78, %s80
    %p84 = scmp.eq.s32.totalorder %s9, 0
    %p85 = por %p83, %p84
    %p86 = scmp.ne.s32.totalorder %s78, %s80
    %p87 = scmp.eq.s32.totalorder %s14, 1
    %p88 = por %p86, %p87
    %p89 = scmp.ne.s32.totalorder %s80, %s81
    %p90 = scmp.eq.s32.totalorder %s14, 0
    %p91 = por %p89, %p90
    %p92 = scmp.ne.s32.totalorder %s80, %s81
    %p93 = scmp.eq.s32.totalorder %s15, 1
    %p94 = por %p92, %p93
    %p96 = scmp.ne.s32.totalorder %s81, %s95
    %p97 = scmp.eq.s32.totalorder %s15, 0
    %p98 = por %p96, %p97
    %s99 = ssub.s32 %s16, %s28
    %s100 = ssub.s32 %s17, %s24
    %s101 = sor.u32 %s99, %s100
    %p102 = scmp.eq.s32.totalorder %s101, 0
    %s104 = sadd.s32 %s103, 1
    %s105 = scalar_select %p102, %s103, %s104
    %p108 = pneg %p102
    %p109 = scmp.eq.s32.totalorder %s9, 1
    %p110 = por %p108, %p109
    %p111 = scmp.ne.s32.totalorder %s103, %s106
    %p112 = scmp.eq.s32.totalorder %s9, 0
    %p113 = por %p111, %p112
    %p114 = scmp.ne.s32.totalorder %s103, %s106
    %p115 = scmp.eq.s32.totalorder %s14, 1
    %p116 = por %p114, %p115
    %p117 = scmp.ne.s32.totalorder %s106, %s107
    %p118 = scmp.eq.s32.totalorder %s14, 0
    %p119 = por %p117, %p118
    %p120 = scmp.ne.s32.totalorder %s106, %s107
    %p121 = scmp.eq.s32.totalorder %s15, 1
    %p122 = por %p120, %p121
    %p124 = scmp.ne.s32.totalorder %s107, %s123
    %p125 = scmp.eq.s32.totalorder %s15, 0
    %p126 = por %p124, %p125
    %p127 = scmp.le.s32.totalorder 1, %s9
    %p128 = scmp.lt.s32.totalorder %s9, 3
    %p129 = pnand %p127, %p128
    %p130 = pneg %p129
    // Predicated region
    $region9: #{conv_model_forward.3} parent=5 // pred_check
      _
    $region10: #{conv_model_forward.3} parent=5 // pred_check_branch
      %132 = sbr.rel (%p129) target = $region12
    $region11: #{conv_model_forward.3} parent=5 // pred_region
      %s133 = ssub.s32 %s9, 1
      // Predicated region
      $region13: #{conv_model_forward.3} parent=11 // pred_check
        %p134 = pneg %p70
      $region14: #{conv_model_forward.3} parent=11 // pred_check_branch
        %136 = sbr.rel (%p134) target = $region16
      $region15: #{conv_model_forward.3} parent=11 // pred_region
        _
      $region16: #{conv_model_forward.3} parent=11 // pred_fallthru
        _
      // Predicated region
      $region17: #{conv_model_forward.3} parent=11 // pred_check
        %p137 = pneg %p91
      $region18: #{conv_model_forward.3} parent=11 // pred_check_branch
        %139 = sbr.rel (%p137) target = $region20
      $region19: #{conv_model_forward.3} parent=11 // pred_region
        _
      $region20: #{conv_model_forward.3} parent=11 // pred_fallthru
        _
    $region12: #{conv_model_forward.3} parent=5 // pred_fallthru
      _
    %p140 = scmp.lt.s32.totalorder %s9, 2
    // Predicated region
    $region21: #{conv_model_forward.3} parent=5 // pred_check
      %p141 = pneg %p140
    $region22: #{conv_model_forward.3} parent=5 // pred_check_branch
      %143 = sbr.rel (%p141) target = $region24
    $region23: #{conv_model_forward.3} parent=5 // pred_region
      // Predicated region
      $region25: #{conv_model_forward.3} parent=23 // pred_check
        %p144 = pneg %p43
      $region26: #{conv_model_forward.3} parent=23 // pred_check_branch
        %146 = sbr.rel (%p144) target = $region28
      $region27: #{conv_model_forward.3} parent=23 // pred_region
        %s147 = smul.u32 2, %s17
        %p148 = scmp.lt.s32.totalorder %s16, 1
        %s149 = scalar_select %p148, %s16, 1
        %p150 = scmp.lt.s32.totalorder %s147, 1
        %s151 = scalar_select %p150, %s147, 1
        %s152 = smul.addr %s149, 8
        %s153 = sadd.s32 %s151, %s152
        %s154 = smul.addr %s153, 4
        %s155 = scalar_lea.vmem %s0, %s154
        %s156 = smul.u32 2, %s17
      $region28: #{conv_model_forward.3} parent=23 // pred_fallthru
        _
    $region24: #{conv_model_forward.3} parent=5 // pred_fallthru
      _
    %p157 = scmp.le.s32.totalorder 1, %s9
    %p158 = scmp.lt.s32.totalorder %s9, 3
    %p159 = pnand %p157, %p158
    %p160 = pneg %p159
    // Predicated region
    $region29: #{conv_model_forward.3} parent=5 // pred_check
      _
    $region30: #{conv_model_forward.3} parent=5 // pred_check_branch
      %162 = sbr.rel (%p159) target = $region32
    $region31: #{conv_model_forward.3} parent=5 // pred_region
      %s163 = ssub.s32 %s9, 1
      %s164 = smul.u32 2, %s19
      %p165 = scmp.lt.s32.totalorder %s18, 1
      %s166 = scalar_select %p165, %s18, 1
      %p167 = scmp.lt.s32.totalorder %s164, 1
      %s168 = scalar_select %p167, %s164, 1
      %s169 = smul.addr %s166, 8
      %s170 = sadd.s32 %s168, %s169
      %s171 = smul.addr %s170, 4
      %s172 = scalar_lea.vmem %s0, %s171
      %p173 = pneg %p49
      %p174 = pneg %p46
      %p175 = pneg %p70
      %p176 = pneg %p67
      %p177 = pneg %p91
      %p178 = pneg %p88
      %p179 = pneg %p119
      %p180 = pneg %p116
      %p181 = scmp.lt.s32.totalorder %s18, 1
      %s182 = scalar_select %p181, %s18, 1
      %p183 = scmp.lt.s32.totalorder %s19, 0
      %s184 = scalar_select %p183, %s19, 0
      %s185 = smul.addr %s182, 4
      %s186 = sadd.s32 %s184, %s185
      %s187 = smul.addr %s186, 4
      %s188 = scalar_lea.vmem %s3, %s187
      %s189 = smul.u32 2, %s19
      %p190 = scmp.lt.s32.totalorder %s18, 1
      %s191 = scalar_select %p190, %s18, 1
      %p192 = scmp.lt.s32.totalorder %s189, 1
      %s193 = scalar_select %p192, %s189, 1
      %s194 = smul.addr %s191, 8
      %s195 = sadd.s32 %s193, %s194
      %s196 = smul.addr %s195, 4
      %s197 = scalar_lea.vmem %s0, %s196
      %s198 = smul.u32 2, %s19
      %p199 = scmp.lt.s32.totalorder %s18, 1
      %s200 = scalar_select %p199, %s18, 1
      %p201 = scmp.lt.s32.totalorder %s19, 0
      %s202 = scalar_select %p201, %s19, 0
      %s203 = smul.addr %s200, 4
      %s204 = sadd.s32 %s202, %s203
      %s205 = smul.addr %s204, 4
      %s206 = scalar_lea.vmem %s3, %s205
      %v208 = vld [vmem:[%s1] sm:$0xf]
      %v209 = vld [vmem:[%s1 + $0x4] sm:$0xf]
      %v210 = vld [vmem:[%s1 + $0x8] sm:$0xf]
      %v211 = vld [vmem:[%s1 + $0xc] sm:$0xf]
      %v212 = vld [vmem:[%s197] sm:$0xff]
      %v213 = vld [vmem:[%s197 + $0x8] sm:$0xff]
      %v214 = vld [vmem:[%s197 + $0x10] sm:$0xff]
      %v215 = vld [vmem:[%s197 + $0x18] sm:$0x33]
      %v220 = vunpack.c.l.b16 %v208
      %v221 = vunpack.c.l.b16 %v209
      %v222 = vunpack.c.l.b16 %v210
      %v223 = vunpack.c.l.b16 %v211
      %v224 = vpack.c.b16 %v221, %v220
      %v225 = vpack.c.b16 %v223, %v222
      %v230 = vunpack.c.l.b16 %v212
      %v231 = vunpack.c.h.b16 %v212
      %v232 = vunpack.c.l.b16 %v213
      %v233 = vunpack.c.h.b16 %v213
      %v234 = vunpack.c.l.b16 %v214
      %v235 = vunpack.c.h.b16 %v214
      %v236 = vunpack.c.l.b16 %v215
      %v237 = vunpack.c.h.b16 %v215
      %v238 = vpack.c.b16 %v232, %v230
      %v239 = vpack.c.b16 %v233, %v231
      %v240 = vpack.c.b16 %v236, %v234
      %v241 = vpack.c.b16 %v237, %v235
      %vm244 = vcmask 220160
      %v246 = vsel %vm244, %v224, 0
      %v249 = vsel %vm244, %v225, 0
      %vm251 = vcmask 1044480
      %vm252 = vcmask 1045504
      %v253 = vsel %vm251, 4294967295, 65535
      %v254 = vsel %vm252, %v253, 0
      %v256 = vand.u32 %v240, %v254
      %v259 = vand.u32 %v241, %v254
      %261 = vmatprep.subr.bf16.mxu0 %v239
      %262 = vmatpush1.bf16.msra.mxu0 %v238
      %263 = vmatprep.subr.bf16.mxu0 %v259
      %264 = vmatpush1.bf16.msra.mxu0 %v256
      %265 = vmatprep.subr.bf16.mxu0 0
      %266 = vmatpush1.bf16.msra.mxu0 0
      %267 = vmatprep.subr.bf16.mxu0 0
      %268 = vmatpush1.bf16.msra.mxu0 0
      %269 = vmatprep.subr.bf16.mxu0 0
      %270 = vmatpush1.bf16.msra.mxu0 0
      %271 = vmatprep.subr.bf16.mxu0 0
      %272 = vmatpush1.bf16.msra.mxu0 0
      %273 = vmatprep.subr.bf16.mxu0 0
      %274 = vmatpush1.bf16.msra.mxu0 0
      %275 = vmatprep.subr.bf16.mxu0 0
      %276 = vmatpush1.bf16.msra.mxu0 0
      %277 = vmatprep.subr.bf16.mxu0 0
      %278 = vmatpush1.bf16.msra.mxu0 0
      %279 = vmatprep.subr.bf16.mxu0 0
      %280 = vmatpush1.bf16.msra.mxu0 0
      %281 = vmatprep.subr.bf16.mxu0 0
      %282 = vmatpush1.bf16.msra.mxu0 0
      %283 = vmatprep.subr.bf16.mxu0 0
      %284 = vmatpush1.bf16.msra.mxu0 0
      %285 = vmatprep.subr.bf16.mxu0 0
      %286 = vmatpush1.bf16.msra.mxu0 0
      %287 = vmatprep.subr.bf16.mxu0 0
      %288 = vmatpush1.bf16.msra.mxu0 0
      %289 = vmatprep.subr.bf16.mxu0 0
      %290 = vmatpush1.bf16.msra.mxu0 0
      %291 = vmatprep.subr.bf16.mxu0 0
      %292 = vmatpush1.bf16.msra.mxu0 0
      %293 = vmatprep.mubr.bf16.mxu0 0
      %294 = vmatmul.mubr.bf16.gmra.mrb[0].mxu0 %v246
      %v295 = vpop.f32.mrb[0].mxu0
      %v296 = vadd.f32 0.0, %v295
      %v297 = vpop.f32.mrb[0].mxu0
      %v298 = vadd.f32 0.0, %v297
      %v299 = vpop.f32.mrb[0].mxu0
      %v300 = vadd.f32 0.0, %v299
      %v301 = vpop.f32.mrb[0].mxu0
      %v302 = vadd.f32 0.0, %v301
      %303 = vmatprep.mubr.bf16.mxu0 0
      %304 = vmatmul.mubr.bf16.gmra.mrb[0].mxu0 %v249
      %v305 = vpop.f32.mrb[0].mxu0
      %v306 = vadd.f32 0.0, %v305
      %v307 = vpop.f32.mrb[0].mxu0
      %v308 = vadd.f32 0.0, %v307
      %v309 = vpop.f32.mrb[0].mxu0
      %v310 = vadd.f32 0.0, %v309
      %v311 = vpop.f32.mrb[0].mxu0
      %v312 = vadd.f32 0.0, %v311
      %313 = vdwg.mxu0
      %318 = vrot.lane.b32.xlu0 %v296, 64
      %v319 = vpop.permute.xlu0 %318
      %320 = vrot.lane.b32.xlu0 %v300, 64
      %v321 = vpop.permute.xlu0 %320
      %322 = vrot.lane.b32.xlu0 %v306, 64
      %v323 = vpop.permute.xlu0 %322
      %324 = vrot.lane.b32.xlu0 %v310, 64
      %v325 = vpop.permute.xlu0 %324
      %v330 = vmax.f32 %v296, %v319
      %v331 = vmax.f32 %v300, %v321
      %v332 = vmax.f32 %v306, %v323
      %v333 = vmax.f32 %v310, %v325
      %338 = vrot.lane.b32.xlu0 %v298, 64
      %v339 = vpop.permute.xlu0 %338
      %340 = vrot.lane.b32.xlu0 %v302, 64
      %v341 = vpop.permute.xlu0 %340
      %342 = vrot.lane.b32.xlu0 %v308, 64
      %v343 = vpop.permute.xlu0 %342
      %344 = vrot.lane.b32.xlu0 %v312, 64
      %v345 = vpop.permute.xlu0 %344
      %v350 = vmax.f32 %v298, %v339
      %v351 = vmax.f32 %v302, %v341
      %v352 = vmax.f32 %v308, %v343
      %v353 = vmax.f32 %v312, %v345
      %v354 = vmax.f32 %v330, %v350
      %v355 = vmax.f32 %v331, %v351
      %v356 = vmax.f32 %v332, %v352
      %v357 = vmax.f32 %v333, %v353
      %v358 = vld [vmem:[%s2] sm:$0xff]
      %v359 = vld [vmem:[%s2 + $0x8] sm:$0xff]
      %v360 = vld [vmem:[%s2 + $0x10] sm:$0xff]
      %v361 = vld [vmem:[%s2 + $0x18] sm:$0xff]
      %363 = vset.pattern.permute.xlu0 0
      %364 = vperm.xlu0 %363, %v358
      %v365 = vpop.permute.xlu0 %364
      %368 = vset.pattern.permute.xlu0 0
      %369 = vperm.xlu0 %368, %v359
      %v370 = vpop.permute.xlu0 %369
      %373 = vset.pattern.permute.xlu0 0
      %374 = vperm.xlu0 %373, %v360
      %v375 = vpop.permute.xlu0 %374
      %378 = vset.pattern.permute.xlu0 0
      %379 = vperm.xlu0 %378, %v361
      %v380 = vpop.permute.xlu0 %379
      %v382 = vadd.f32 %v354, %v365
      %v383 = vadd.f32 %v355, %v370
      %v384 = vadd.f32 %v356, %v375
      %v385 = vadd.f32 %v357, %v380
      %v386 = vmax.f32 %v382, 0.0
      %v387 = vmax.f32 %v383, 0.0
      %v388 = vmax.f32 %v384, 0.0
      %v389 = vmax.f32 %v385, 0.0
      %v390 = vpack.c.bf16 %v387, %v386
      %v391 = vpack.c.bf16 %v389, %v388
      %v394 = vunpack.c.l.b16 %v390
      %v395 = vunpack.c.h.b16 %v390
      %v396 = vunpack.c.l.b16 %v391
      %v397 = vunpack.c.h.b16 %v391
      %v398 = vpack.c.b16 %v394, %v394
      %v399 = vpack.c.b16 %v395, %v395
      %v400 = vpack.c.b16 %v396, %v396
      %v401 = vpack.c.b16 %v397, %v397
      %vm406 = vcmask 519168
      %407 = vst.msk [vmem:[%s206] sm:$0xf] %vm406, %v398
      %408 = vst.msk [vmem:[%s206 + $0x4] sm:$0xf] %vm406, %v399
      %409 = vst.msk [vmem:[%s206 + $0x8] sm:$0xf] %vm406, %v400
      %410 = vst.msk [vmem:[%s206 + $0xc] sm:$0xf] %vm406, %v401
      %p411 = scmp.lt.s32.totalorder %s18, 1
      %s412 = scalar_select %p411, %s18, 1
      %p413 = scmp.lt.s32.totalorder %s19, 0
      %s414 = scalar_select %p413, %s19, 0
      %s415 = smul.addr %s412, 4
      %s416 = sadd.s32 %s414, %s415
      %s417 = smul.addr %s416, 4
      %s418 = scalar_lea.vmem %s3, %s417
      // Predicated region
      $region33: #{conv_model_forward.3} parent=31 // pred_check
        %p419 = pneg %p116
      $region34: #{conv_model_forward.3} parent=31 // pred_check_branch
        %421 = sbr.rel (%p419) target = $region36
      $region35: #{conv_model_forward.3} parent=31 // pred_region
        _
      $region36: #{conv_model_forward.3} parent=31 // pred_fallthru
        _
    $region32: #{conv_model_forward.3} parent=5 // pred_fallthru
      _
    %p422 = scmp.le.s32.totalorder 2, %s9
    // Predicated region
    $region37: #{conv_model_forward.3} parent=5 // pred_check
      %p423 = pneg %p422
    $region38: #{conv_model_forward.3} parent=5 // pred_check_branch
      %425 = sbr.rel (%p423) target = $region40
    $region39: #{conv_model_forward.3} parent=5 // pred_region
      %s426 = ssub.s32 %s9, 2
      // Predicated region
      $region41: #{conv_model_forward.3} parent=39 // pred_check
        %p427 = pneg %p122
      $region42: #{conv_model_forward.3} parent=39 // pred_check_branch
        %429 = sbr.rel (%p427) target = $region44
      $region43: #{conv_model_forward.3} parent=39 // pred_region
        %p430 = scmp.lt.s32.totalorder %s20, 1
        %s431 = scalar_select %p430, %s20, 1
        %p432 = scmp.lt.s32.totalorder %s21, 0
        %s433 = scalar_select %p432, %s21, 0
        %s434 = smul.addr %s431, 4
        %s435 = sadd.s32 %s433, %s434
        %s436 = smul.addr %s435, 4
        %s437 = scalar_lea.vmem %s3, %s436
      $region44: #{conv_model_forward.3} parent=39 // pred_fallthru
        _
    $region40: #{conv_model_forward.3} parent=5 // pred_fallthru
      _
  $region6: #{conv_model_forward.3} parent=0 // loop_footer
    %s13 = sadd.s32 1, %s9
  $region7: #{conv_model_forward.3} parent=0 // loop_footer_branch
    %8 = sbr.rel target = $region3
  $region8: #{conv_model_forward.3} parent=0 // loop_exit
    _

// kernel: conv_model_forward.4
$region0: #{conv_model_forward.4}
  #allocation0 [shape = 'u32[]', space=smem, size = 0x4, offset = 0x4, fixed_abs, tag = 'smem constant byte address 0x4 - core index']
  #allocation1 [shape = 'u32[144,128]{1,0:T(1,128)}', space=vmem, size = 0x12000, scoped, tag = 'internal scratch']
  %s0 = inlined_call_operand.vmem [shape: bf16[2,288,64], index: 0, kind: input, shape index: {}]
  %s1 = inlined_call_operand.vmem [shape: bf16[32,288], index: 1, kind: input, shape index: {}]
  %s2 = inlined_call_operand.vmem [shape: f32[32,1], index: 2, kind: input, shape index: {}]
  %s3 = inlined_call_operand.vmem [shape: bf16[2,32,16], index: 3, kind: output, shape index: {}]
  %s4 = sld [smem:[#allocation0]]
  $region45: #{conv_model_forward.4} parent=0
    _
  %s6 = ssub.s32 1, %s4
  %s7 = scalar_select 0, %s6, %s4
  loop: start=0, step=1, limit=4
  $region2: #{conv_model_forward.4} parent=0 // loop_pre_header
    _
  $region3: #{conv_model_forward.4} parent=0 // loop_header
    %s9 = sphi 0, %s13
    %p10 = scmp.ge.s32.totalorder %s9, 4
    %s16 = sphi 0, %s28
    %s17 = sphi 0, %s24
    %s18 = sphi 0, %s16
    %s19 = sphi 0, %s17
    %s20 = sphi 0, %s18
    %s21 = sphi 0, %s19
    %s33 = sphi 0, %s35
    %s36 = sphi 0, %s33
    %s37 = sphi 0, %s36
    %s53 = sphi 0, %s37
    %s57 = sphi 0, %s57
    %s59 = sphi 0, %s57
    %s60 = sphi 0, %s59
    %s74 = sphi 0, %s60
    %s78 = sphi 0, %s78
    %s80 = sphi 0, %s78
    %s81 = sphi 0, %s80
    %s95 = sphi 0, %s81
    %s103 = sphi 0, %s105
    %s106 = sphi 0, %s103
    %s107 = sphi 0, %s106
    %s123 = sphi 0, %s107
  $region4: #{conv_model_forward.4} parent=0 // loop_header_branch
    %12 = sbr.rel (%p10) target = $region8
  $region5: #{conv_model_forward.4} parent=0 // loop_body
    %s14 = ssub.s32 %s9, 1
    %s15 = ssub.s32 %s9, 2
    %s22 = sadd.s32 1, %s17
    %p23 = scmp.ge.s32.totalorder %s22, 1
    %s24 = scalar_select %p23, 0, %s22
    %s25 = sadd.s32 1, %s16
    %s26 = scalar_select %p23, %s25, %s16
    %p27 = scmp.ge.s32.totalorder %s26, 2
    %s28 = scalar_select %p27, 0, %s26
    %s29 = ssub.s32 %s16, %s28
    %s30 = ssub.s32 %s17, %s24
    %s31 = sor.u32 %s29, %s30
    %p32 = scmp.eq.s32.totalorder %s31, 0
    %s34 = sadd.s32 %s33, 1
    %s35 = scalar_select %p32, %s33, %s34
    %p38 = pneg %p32
    %p39 = scmp.eq.s32.totalorder %s9, 1
    %p40 = por %p38, %p39
    %p41 = scmp.ne.s32.totalorder %s33, %s36
    %p42 = scmp.eq.s32.totalorder %s9, 0
    %p43 = por %p41, %p42
    %p44 = scmp.ne.s32.totalorder %s33, %s36
    %p45 = scmp.eq.s32.totalorder %s14, 1
    %p46 = por %p44, %p45
    %p47 = scmp.ne.s32.totalorder %s36, %s37
    %p48 = scmp.eq.s32.totalorder %s14, 0
    %p49 = por %p47, %p48
    %p50 = scmp.ne.s32.totalorder %s36, %s37
    %p51 = scmp.eq.s32.totalorder %s15, 1
    %p52 = por %p50, %p51
    %p54 = scmp.ne.s32.totalorder %s37, %s53
    %p55 = scmp.eq.s32.totalorder %s15, 0
    %p56 = por %p54, %p55
    %s58 = sadd.s32 %s57, 1
    %p61 = scmp.eq.s32.totalorder %s9, 1
    %p62 = scmp.ne.s32.totalorder %s57, %s59
    %p63 = scmp.eq.s32.totalorder %s9, 0
    %p64 = por %p62, %p63
    %p65 = scmp.ne.s32.totalorder %s57, %s59
    %p66 = scmp.eq.s32.totalorder %s14, 1
    %p67 = por %p65, %p66
    %p68 = scmp.ne.s32.totalorder %s59, %s60
    %p69 = scmp.eq.s32.totalorder %s14, 0
    %p70 = por %p68, %p69
    %p71 = scmp.ne.s32.totalorder %s59, %s60
    %p72 = scmp.eq.s32.totalorder %s15, 1
    %p73 = por %p71, %p72
    %p75 = scmp.ne.s32.totalorder %s60, %s74
    %p76 = scmp.eq.s32.totalorder %s15, 0
    %p77 = por %p75, %p76
    %s79 = sadd.s32 %s78, 1
    %p82 = scmp.eq.s32.totalorder %s9, 1
    %p83 = scmp.ne.s32.totalorder %s78, %s80
    %p84 = scmp.eq.s32.totalorder %s9, 0
    %p85 = por %p83, %p84
    %p86 = scmp.ne.s32.totalorder %s78, %s80
    %p87 = scmp.eq.s32.totalorder %s14, 1
    %p88 = por %p86, %p87
    %p89 = scmp.ne.s32.totalorder %s80, %s81
    %p90 = scmp.eq.s32.totalorder %s14, 0
    %p91 = por %p89, %p90
    %p92 = scmp.ne.s32.totalorder %s80, %s81
    %p93 = scmp.eq.s32.totalorder %s15, 1
    %p94 = por %p92, %p93
    %p96 = scmp.ne.s32.totalorder %s81, %s95
    %p97 = scmp.eq.s32.totalorder %s15, 0
    %p98 = por %p96, %p97
    %s99 = ssub.s32 %s16, %s28
    %s100 = ssub.s32 %s17, %s24
    %s101 = sor.u32 %s99, %s100
    %p102 = scmp.eq.s32.totalorder %s101, 0
    %s104 = sadd.s32 %s103, 1
    %s105 = scalar_select %p102, %s103, %s104
    %p108 = pneg %p102
    %p109 = scmp.eq.s32.totalorder %s9, 1
    %p110 = por %p108, %p109
    %p111 = scmp.ne.s32.totalorder %s103, %s106
    %p112 = scmp.eq.s32.totalorder %s9, 0
    %p113 = por %p111, %p112
    %p114 = scmp.ne.s32.totalorder %s103, %s106
    %p115 = scmp.eq.s32.totalorder %s14, 1
    %p116 = por %p114, %p115
    %p117 = scmp.ne.s32.totalorder %s106, %s107
    %p118 = scmp.eq.s32.totalorder %s14, 0
    %p119 = por %p117, %p118
    %p120 = scmp.ne.s32.totalorder %s106, %s107
    %p121 = scmp.eq.s32.totalorder %s15, 1
    %p122 = por %p120, %p121
    %p124 = scmp.ne.s32.totalorder %s107, %s123
    %p125 = scmp.eq.s32.totalorder %s15, 0
    %p126 = por %p124, %p125
    %p127 = scmp.le.s32.totalorder 1, %s9
    %p128 = scmp.lt.s32.totalorder %s9, 3
    %p129 = pnand %p127, %p128
    %p130 = pneg %p129
    // Predicated region
    $region9: #{conv_model_forward.4} parent=5 // pred_check
      _
    $region10: #{conv_model_forward.4} parent=5 // pred_check_branch
      %132 = sbr.rel (%p129) target = $region12
    $region11: #{conv_model_forward.4} parent=5 // pred_region
      %s133 = ssub.s32 %s9, 1
      // Predicated region
      $region13: #{conv_model_forward.4} parent=11 // pred_check
        %p134 = pneg %p70
      $region14: #{conv_model_forward.4} parent=11 // pred_check_branch
        %136 = sbr.rel (%p134) target = $region16
      $region15: #{conv_model_forward.4} parent=11 // pred_region
        _
      $region16: #{conv_model_forward.4} parent=11 // pred_fallthru
        _
      // Predicated region
      $region17: #{conv_model_forward.4} parent=11 // pred_check
        %p137 = pneg %p91
      $region18: #{conv_model_forward.4} parent=11 // pred_check_branch
        %139 = sbr.rel (%p137) target = $region20
      $region19: #{conv_model_forward.4} parent=11 // pred_region
        _
      $region20: #{conv_model_forward.4} parent=11 // pred_fallthru
        _
    $region12: #{conv_model_forward.4} parent=5 // pred_fallthru
      _
    %p140 = scmp.lt.s32.totalorder %s9, 2
    // Predicated region
    $region21: #{conv_model_forward.4} parent=5 // pred_check
      %p141 = pneg %p140
    $region22: #{conv_model_forward.4} parent=5 // pred_check_branch
      %143 = sbr.rel (%p141) target = $region24
    $region23: #{conv_model_forward.4} parent=5 // pred_region
      // Predicated region
      $region25: #{conv_model_forward.4} parent=23 // pred_check
        %p144 = pneg %p43
      $region26: #{conv_model_forward.4} parent=23 // pred_check_branch
        %146 = sbr.rel (%p144) target = $region28
      $region27: #{conv_model_forward.4} parent=23 // pred_region
        %p147 = scmp.lt.s32.totalorder %s16, 1
        %s148 = scalar_select %p147, %s16, 1
        %p149 = scmp.lt.s32.totalorder %s17, 0
        %s150 = scalar_select %p149, %s17, 0
        %s151 = smul.addr %s148, 36
        %s152 = sadd.s32 %s150, %s151
        %s153 = smul.addr %s152, 4
        %s154 = scalar_lea.vmem %s0, %s153
      $region28: #{conv_model_forward.4} parent=23 // pred_fallthru
        _
    $region24: #{conv_model_forward.4} parent=5 // pred_fallthru
      _
    %p155 = scmp.le.s32.totalorder 1, %s9
    %p156 = scmp.lt.s32.totalorder %s9, 3
    %p157 = pnand %p155, %p156
    %p158 = pneg %p157
    // Predicated region
    $region29: #{conv_model_forward.4} parent=5 // pred_check
      _
    $region30: #{conv_model_forward.4} parent=5 // pred_check_branch
      %160 = sbr.rel (%p157) target = $region32
    $region31: #{conv_model_forward.4} parent=5 // pred_region
      %s161 = ssub.s32 %s9, 1
      %p162 = scmp.lt.s32.totalorder %s18, 1
      %s163 = scalar_select %p162, %s18, 1
      %p164 = scmp.lt.s32.totalorder %s19, 0
      %s165 = scalar_select %p164, %s19, 0
      %s166 = smul.addr %s163, 36
      %s167 = sadd.s32 %s165, %s166
      %s168 = smul.addr %s167, 4
      %s169 = scalar_lea.vmem %s0, %s168
      %p170 = pneg %p49
      %p171 = pneg %p46
      %p172 = pneg %p70
      %p173 = pneg %p67
      %p174 = pneg %p91
      %p175 = pneg %p88
      %p176 = pneg %p119
      %p177 = pneg %p116
      %p178 = scmp.lt.s32.totalorder %s18, 1
      %s179 = scalar_select %p178, %s18, 1
      %p180 = scmp.lt.s32.totalorder %s19, 0
      %s181 = scalar_select %p180, %s19, 0
      %s182 = smul.addr %s179, 4
      %s183 = sadd.s32 %s181, %s182
      %s184 = smul.addr %s183, 4
      %s185 = scalar_lea.vmem %s3, %s184
      %p186 = scmp.lt.s32.totalorder %s18, 1
      %s187 = scalar_select %p186, %s18, 1
      %p188 = scmp.lt.s32.totalorder %s19, 0
      %s189 = scalar_select %p188, %s19, 0
      %s190 = smul.addr %s187, 36
      %s191 = sadd.s32 %s189, %s190
      %s192 = smul.addr %s191, 4
      %s193 = scalar_lea.vmem %s0, %s192
      %p194 = scmp.lt.s32.totalorder %s18, 1
      %s195 = scalar_select %p194, %s18, 1
      %p196 = scmp.lt.s32.totalorder %s19, 0
      %s197 = scalar_select %p196, %s19, 0
      %s198 = smul.addr %s195, 4
      %s199 = sadd.s32 %s197, %s198
      %s200 = smul.addr %s199, 4
      %s201 = scalar_lea.vmem %s3, %s200
      %v203 = vld [vmem:[%s1] sm:$0xff]
      %v204 = vld [vmem:[%s1 + $0x8] sm:$0xf]
      %v205 = vld [vmem:[%s1 + $0xc] sm:$0xff]
      %v206 = vld [vmem:[%s1 + $0x14] sm:$0xf]
      %v207 = vld [vmem:[%s1 + $0x18] sm:$0xff]
      %v208 = vld [vmem:[%s1 + $0x20] sm:$0xf]
      %v209 = vld [vmem:[%s1 + $0x24] sm:$0xff]
      %v210 = vld [vmem:[%s1 + $0x2c] sm:$0xf]
      %v211 = vld [vmem:[%s193] sm:$0xf]
      %v212 = vld [vmem:[%s193 + $0x4] sm:$0xf]
      %v213 = vld [vmem:[%s193 + $0x8] sm:$0xf]
      %v214 = vld [vmem:[%s193 + $0xc] sm:$0xf]
      %v215 = vld [vmem:[%s193 + $0x10] sm:$0xf]
      %v216 = vld [vmem:[%s193 + $0x14] sm:$0xf]
      %v217 = vld [vmem:[%s193 + $0x18] sm:$0xf]
      %v218 = vld [vmem:[%s193 + $0x1c] sm:$0xf]
      %v219 = vld [vmem:[%s193 + $0x20] sm:$0xf]
      %v220 = vld [vmem:[%s193 + $0x24] sm:$0xf]
      %v221 = vld [vmem:[%s193 + $0x28] sm:$0xf]
      %v222 = vld [vmem:[%s193 + $0x2c] sm:$0xf]
      %v223 = vld [vmem:[%s193 + $0x30] sm:$0xf]
      %v224 = vld [vmem:[%s193 + $0x34] sm:$0xf]
      %v225 = vld [vmem:[%s193 + $0x38] sm:$0xf]
      %v226 = vld [vmem:[%s193 + $0x3c] sm:$0xf]
      %v227 = vld [vmem:[%s193 + $0x40] sm:$0xf]
      %v228 = vld [vmem:[%s193 + $0x44] sm:$0xf]
      %v229 = vld [vmem:[%s193 + $0x48] sm:$0xf]
      %v230 = vld [vmem:[%s193 + $0x4c] sm:$0xf]
      %v231 = vld [vmem:[%s193 + $0x50] sm:$0xf]
      %v232 = vld [vmem:[%s193 + $0x54] sm:$0xf]
      %v233 = vld [vmem:[%s193 + $0x58] sm:$0xf]
      %v234 = vld [vmem:[%s193 + $0x5c] sm:$0xf]
      %v235 = vld [vmem:[%s193 + $0x60] sm:$0xf]
      %v236 = vld [vmem:[%s193 + $0x64] sm:$0xf]
      %v237 = vld [vmem:[%s193 + $0x68] sm:$0xf]
      %v238 = vld [vmem:[%s193 + $0x6c] sm:$0xf]
      %v239 = vld [vmem:[%s193 + $0x70] sm:$0xf]
      %v240 = vld [vmem:[%s193 + $0x74] sm:$0xf]
      %v241 = vld [vmem:[%s193 + $0x78] sm:$0xf]
      %v242 = vld [vmem:[%s193 + $0x7c] sm:$0xf]
      %v243 = vld [vmem:[%s193 + $0x80] sm:$0xf]
      %v244 = vld [vmem:[%s193 + $0x84] sm:$0xf]
      %v245 = vld [vmem:[%s193 + $0x88] sm:$0xf]
      %v246 = vld [vmem:[%s193 + $0x8c] sm:$0xf]
      %v255 = vunpack.c.l.b16 %v203
      %v256 = vunpack.c.h.b16 %v203
      %v257 = vunpack.c.l.b16 %v204
      %v258 = vunpack.c.l.b16 %v205
      %v259 = vunpack.c.h.b16 %v205
      %v260 = vunpack.c.l.b16 %v206
      %v261 = vunpack.c.l.b16 %v207
      %v262 = vunpack.c.h.b16 %v207
      %v263 = vunpack.c.l.b16 %v208
      %v264 = vunpack.c.l.b16 %v209
      %v265 = vunpack.c.h.b16 %v209
      %v266 = vunpack.c.l.b16 %v210
      %v267 = vpack.c.b16 %v258, %v255
      %v268 = vpack.c.b16 %v259, %v256
      %v269 = vpack.c.b16 %v260, %v257
      %v270 = vpack.c.b16 %v264, %v261
      %v271 = vpack.c.b16 %v265, %v262
      %v272 = vpack.c.b16 %v266, %v263
      %v313 = vunpack.c.l.b16 %v211
      %v314 = vunpack.c.l.b16 %v212
      %v315 = vunpack.c.l.b16 %v213
      %v316 = vunpack.c.l.b16 %v214
      %v317 = vunpack.c.l.b16 %v215
      %v318 = vunpack.c.l.b16 %v216
      %v319 = vunpack.c.l.b16 %v217
      %v320 = vunpack.c.l.b16 %v218
      %v321 = vunpack.c.l.b16 %v219
      %v322 = vunpack.c.l.b16 %v220
      %v323 = vunpack.c.l.b16 %v221
      %v324 = vunpack.c.l.b16 %v222
      %v325 = vunpack.c.l.b16 %v223
      %v326 = vunpack.c.l.b16 %v224
      %v327 = vunpack.c.l.b16 %v225
      %v328 = vunpack.c.l.b16 %v226
      %v329 = vunpack.c.l.b16 %v227
      %v330 = vunpack.c.l.b16 %v228
      %v331 = vunpack.c.l.b16 %v229
      %v332 = vunpack.c.l.b16 %v230
      %v333 = vunpack.c.l.b16 %v231
      %v334 = vunpack.c.l.b16 %v232
      %v335 = vunpack.c.l.b16 %v233
      %v336 = vunpack.c.l.b16 %v234
      %v337 = vunpack.c.l.b16 %v235
      %v338 = vunpack.c.l.b16 %v236
      %v339 = vunpack.c.l.b16 %v237
      %v340 = vunpack.c.l.b16 %v238
      %v341 = vunpack.c.l.b16 %v239
      %v342 = vunpack.c.l.b16 %v240
      %v343 = vunpack.c.l.b16 %v241
      %v344 = vunpack.c.l.b16 %v242
      %v345 = vunpack.c.l.b16 %v243
      %v346 = vunpack.c.l.b16 %v244
      %v347 = vunpack.c.l.b16 %v245
      %v348 = vunpack.c.l.b16 %v246
      %v349 = vpack.c.b16 %v314, %v313
      %v350 = vpack.c.b16 %v316, %v315
      %v351 = vpack.c.b16 %v318, %v317
      %v352 = vpack.c.b16 %v320, %v319
      %v353 = vpack.c.b16 %v322, %v321
      %v354 = vpack.c.b16 %v324, %v323
      %v355 = vpack.c.b16 %v326, %v325
      %v356 = vpack.c.b16 %v328, %v327
      %v357 = vpack.c.b16 %v330, %v329
      %v358 = vpack.c.b16 %v332, %v331
      %v359 = vpack.c.b16 %v334, %v333
      %v360 = vpack.c.b16 %v336, %v335
      %v361 = vpack.c.b16 %v338, %v337
      %v362 = vpack.c.b16 %v340, %v339
      %v363 = vpack.c.b16 %v342, %v341
      %v364 = vpack.c.b16 %v344, %v343
      %v365 = vpack.c.b16 %v346, %v345
      %v366 = vpack.c.b16 %v348, %v347
      %vm385 = vcmask 261120
      %v387 = vsel %vm385, %v269, 0
      %v390 = vsel %vm385, %v272, 0
      %392 = vmatprep.subr.bf16.mxu0 0
      %393 = vmatpush1.bf16.msra.mxu0 %v349
      %394 = vmatprep.subr.bf16.mxu0 0
      %395 = vmatpush1.bf16.msra.mxu0 %v350
      %396 = vmatprep.subr.bf16.mxu0 0
      %397 = vmatpush1.bf16.msra.mxu0 %v351
      %398 = vmatprep.subr.bf16.mxu0 0
      %399 = vmatpush1.bf16.msra.mxu0 %v352
      %400 = vmatprep.subr.bf16.mxu0 0
      %401 = vmatpush1.bf16.msra.mxu0 %v353
      %402 = vmatprep.subr.bf16.mxu0 0
      %403 = vmatpush1.bf16.msra.mxu0 %v354
      %404 = vmatprep.subr.bf16.mxu0 0
      %405 = vmatpush1.bf16.msra.mxu0 %v355
      %406 = vmatprep.subr.bf16.mxu0 0
      %407 = vmatpush1.bf16.msra.mxu0 %v356
      %408 = vmatprep.subr.bf16.mxu0 0
      %409 = vmatpush1.bf16.msra.mxu0 %v357
      %410 = vmatprep.subr.bf16.mxu0 0
      %411 = vmatpush1.bf16.msra.mxu0 %v358
      %412 = vmatprep.subr.bf16.mxu0 0
      %413 = vmatpush1.bf16.msra.mxu0 %v359
      %414 = vmatprep.subr.bf16.mxu0 0
      %415 = vmatpush1.bf16.msra.mxu0 %v360
      %416 = vmatprep.subr.bf16.mxu0 0
      %417 = vmatpush1.bf16.msra.mxu0 %v361
      %418 = vmatprep.subr.bf16.mxu0 0
      %419 = vmatpush1.bf16.msra.mxu0 %v362
      %420 = vmatprep.subr.bf16.mxu0 0
      %421 = vmatpush1.bf16.msra.mxu0 %v363
      %422 = vmatprep.subr.bf16.mxu0 0
      %423 = vmatpush1.bf16.msra.mxu0 %v364
      %424 = vmatprep.mubr.bf16.mxu0 %v268
      %425 = vmatmul.mubr.bf16.gmra.mrb[0].mxu0 %v267
      %v426 = vpop.f32.mrb[0].mxu0
      %v427 = vadd.f32 0.0, %v426
      %v428 = vpop.f32.mrb[0].mxu0
      %v429 = vpop.f32.mrb[0].mxu0
      %v430 = vadd.f32 0.0, %v429
      %v431 = vpop.f32.mrb[0].mxu0
      %432 = vmatprep.mubr.bf16.mxu0 %v271
      %433 = vmatmul.mubr.bf16.gmra.mrb[0].mxu0 %v270
      %v434 = vpop.f32.mrb[0].mxu0
      %v435 = vadd.f32 0.0, %v434
      %v436 = vpop.f32.mrb[0].mxu0
      %v437 = vpop.f32.mrb[0].mxu0
      %v438 = vadd.f32 0.0, %v437
      %v439 = vpop.f32.mrb[0].mxu0
      %440 = vdwg.mxu0
      %441 = vmatprep.subr.bf16.mxu0 0
      %442 = vmatpush1.bf16.msra.mxu0 %v365
      %443 = vmatprep.subr.bf16.mxu0 0
      %444 = vmatpush1.bf16.msra.mxu0 %v366
      %445 = vmatprep.subr.bf16.mxu0 0
      %446 = vmatpush1.bf16.msra.mxu0 0
      %447 = vmatprep.subr.bf16.mxu0 0
      %448 = vmatpush1.bf16.msra.mxu0 0
      %449 = vmatprep.subr.bf16.mxu0 0
      %450 = vmatpush1.bf16.msra.mxu0 0
      %451 = vmatprep.subr.bf16.mxu0 0
      %452 = vmatpush1.bf16.msra.mxu0 0
      %453 = vmatprep.subr.bf16.mxu0 0
      %454 = vmatpush1.bf16.msra.mxu0 0
      %455 = vmatprep.subr.bf16.mxu0 0
      %456 = vmatpush1.bf16.msra.mxu0 0
      %457 = vmatprep.subr.bf16.mxu0 0
      %458 = vmatpush1.bf16.msra.mxu0 0
      %459 = vmatprep.subr.bf16.mxu0 0
      %460 = vmatpush1.bf16.msra.mxu0 0
      %461 = vmatprep.subr.bf16.mxu0 0
      %462 = vmatpush1.bf16.msra.mxu0 0
      %463 = vmatprep.subr.bf16.mxu0 0
      %464 = vmatpush1.bf16.msra.mxu0 0
      %465 = vmatprep.subr.bf16.mxu0 0
      %466 = vmatpush1.bf16.msra.mxu0 0
      %467 = vmatprep.subr.bf16.mxu0 0
      %468 = vmatpush1.bf16.msra.mxu0 0
      %469 = vmatprep.subr.bf16.mxu0 0
      %470 = vmatpush1.bf16.msra.mxu0 0
      %471 = vmatprep.subr.bf16.mxu0 0
      %472 = vmatpush1.bf16.msra.mxu0 0
      %473 = vmatprep.mubr.bf16.mxu0 0
      %474 = vmatmul.mubr.bf16.gmra.mrb[0].mxu0 %v387
      %v475 = vpop.f32.mrb[0].mxu0
      %v476 = vadd.f32 %v427, %v475
      %v477 = vpop.f32.mrb[0].mxu0
      %v478 = vpop.f32.mrb[0].mxu0
      %v479 = vadd.f32 %v430, %v478
      %v480 = vpop.f32.mrb[0].mxu0
      %481 = vmatprep.mubr.bf16.mxu0 0
      %482 = vmatmul.mubr.bf16.gmra.mrb[0].mxu0 %v390
      %v483 = vpop.f32.mrb[0].mxu0
      %v484 = vadd.f32 %v435, %v483
      %v485 = vpop.f32.mrb[0].mxu0
      %v486 = vpop.f32.mrb[0].mxu0
      %v487 = vadd.f32 %v438, %v486
      %v488 = vpop.f32.mrb[0].mxu0
      %489 = vdwg.mxu0
      %494 = vrot.lane.b32.xlu0 %v476, 112
      %v495 = vpop.permute.xlu0 %494
      %496 = vrot.lane.b32.xlu0 %v479, 112
      %v497 = vpop.permute.xlu0 %496
      %498 = vrot.lane.b32.xlu0 %v484, 112
      %v499 = vpop.permute.xlu0 %498
      %500 = vrot.lane.b32.xlu0 %v487, 112
      %v501 = vpop.permute.xlu0 %500
      %v506 = vmax.f32 %v476, %v495
      %v507 = vmax.f32 %v479, %v497
      %v508 = vmax.f32 %v484, %v499
      %v509 = vmax.f32 %v487, %v501
      %514 = vrot.lane.b32.xlu0 %v506, 96
      %v515 = vpop.permute.xlu0 %514
      %516 = vrot.lane.b32.xlu0 %v507, 96
      %v517 = vpop.permute.xlu0 %516
      %518 = vrot.lane.b32.xlu0 %v508, 96
      %v519 = vpop.permute.xlu0 %518
      %520 = vrot.lane.b32.xlu0 %v509, 96
      %v521 = vpop.permute.xlu0 %520
      %v526 = vmax.f32 %v506, %v515
      %v527 = vmax.f32 %v507, %v517
      %v528 = vmax.f32 %v508, %v519
      %v529 = vmax.f32 %v509, %v521
      %v530 = vld [vmem:[%s2] sm:$0xff]
      %v531 = vld [vmem:[%s2 + $0x8] sm:$0xff]
      %v532 = vld [vmem:[%s2 + $0x10] sm:$0xff]
      %v533 = vld [vmem:[%s2 + $0x18] sm:$0xff]
      %535 = vset.pattern.permute.xlu0 0
      %536 = vperm.xlu0 %535, %v530
      %v537 = vpop.permute.xlu0 %536
      %540 = vset.pattern.permute.xlu0 0
      %541 = vperm.xlu0 %540, %v531
      %v542 = vpop.permute.xlu0 %541
      %545 = vset.pattern.permute.xlu0 0
      %546 = vperm.xlu0 %545, %v532
      %v547 = vpop.permute.xlu0 %546
      %550 = vset.pattern.permute.xlu0 0
      %551 = vperm.xlu0 %550, %v533
      %v552 = vpop.permute.xlu0 %551
      %v554 = vadd.f32 %v526, %v537
      %v555 = vadd.f32 %v527, %v542
      %v556 = vadd.f32 %v528, %v547
      %v557 = vadd.f32 %v529, %v552
      %v558 = vmax.f32 %v554, 0.0
      %v559 = vmax.f32 %v555, 0.0
      %v560 = vmax.f32 %v556, 0.0
      %v561 = vmax.f32 %v557, 0.0
      %v562 = vpack.c.bf16 %v559, %v558
      %v563 = vpack.c.bf16 %v561, %v560
      %v566 = vunpack.c.l.b16 %v562
      %v567 = vunpack.c.h.b16 %v562
      %v568 = vunpack.c.l.b16 %v563
      %v569 = vunpack.c.h.b16 %v563
      %v570 = vpack.c.b16 %v566, %v566
      %v571 = vpack.c.b16 %v567, %v567
      %v572 = vpack.c.b16 %v568, %v568
      %v573 = vpack.c.b16 %v569, %v569
      %vm578 = vcmask 125952
      %579 = vst.msk [vmem:[%s201] sm:$0xf] %vm578, %v570
      %580 = vst.msk [vmem:[%s201 + $0x4] sm:$0xf] %vm578, %v571
      %581 = vst.msk [vmem:[%s201 + $0x8] sm:$0xf] %vm578, %v572
      %582 = vst.msk [vmem:[%s201 + $0xc] sm:$0xf] %vm578, %v573
      %p583 = scmp.lt.s32.totalorder %s18, 1
      %s584 = scalar_select %p583, %s18, 1
      %p585 = scmp.lt.s32.totalorder %s19, 0
      %s586 = scalar_select %p585, %s19, 0
      %s587 = smul.addr %s584, 4
      %s588 = sadd.s32 %s586, %s587
      %s589 = smul.addr %s588, 4
      %s590 = scalar_lea.vmem %s3, %s589
      // Predicated region
      $region33: #{conv_model_forward.4} parent=31 // pred_check
        %p591 = pneg %p116
      $region34: #{conv_model_forward.4} parent=31 // pred_check_branch
        %593 = sbr.rel (%p591) target = $region36
      $region35: #{conv_model_forward.4} parent=31 // pred_region
        _
      $region36: #{conv_model_forward.4} parent=31 // pred_fallthru
        _
    $region32: #{conv_model_forward.4} parent=5 // pred_fallthru
      _
    %p594 = scmp.le.s32.totalorder 2, %s9
    // Predicated region
    $region37: #{conv_model_forward.4} parent=5 // pred_check
      %p595 = pneg %p594
    $region38: #{conv_model_forward.4} parent=5 // pred_check_branch
      %597 = sbr.rel (%p595) target = $region40
    $region39: #{conv_model_forward.4} parent=5 // pred_region
      %s598 = ssub.s32 %s9, 2
      // Predicated region
      $region41: #{conv_model_forward.4} parent=39 // pred_check
        %p599 = pneg %p122
      $region42: #{conv_model_forward.4} parent=39 // pred_check_branch
        %601 = sbr.rel (%p599) target = $region44
      $region43: #{conv_model_forward.4} parent=39 // pred_region
        %p602 = scmp.lt.s32.totalorder %s20, 1
        %s603 = scalar_select %p602, %s20, 1
        %p604 = scmp.lt.s32.totalorder %s21, 0
        %s605 = scalar_select %p604, %s21, 0
        %s606 = smul.addr %s603, 4
        %s607 = sadd.s32 %s605, %s606
        %s608 = smul.addr %s607, 4
        %s609 = scalar_lea.vmem %s3, %s608
      $region44: #{conv_model_forward.4} parent=39 // pred_fallthru
        _
    $region40: #{conv_model_forward.4} parent=5 // pred_fallthru
      _
  $region6: #{conv_model_forward.4} parent=0 // loop_footer
    %s13 = sadd.s32 1, %s9
  $region7: #{conv_model_forward.4} parent=0 // loop_footer_branch
    %8 = sbr.rel target = $region3
  $region8: #{conv_model_forward.4} parent=0 // loop_exit
    _

// kernel: conv_model_forward.5
$region0: #{conv_model_forward.5}
  #allocation0 [shape = 'u32[]', space=smem, size = 0x4, offset = 0x4, fixed_abs, tag = 'smem constant byte address 0x4 - core index']
  #allocation1 [shape = 'u32[144,128]{1,0:T(1,128)}', space=vmem, size = 0x12000, scoped, tag = 'internal scratch']
  %s0 = inlined_call_operand.vmem [shape: bf16[2,288,16], index: 0, kind: input, shape index: {}]
  %s1 = inlined_call_operand.vmem [shape: bf16[16,288], index: 1, kind: input, shape index: {}]
  %s2 = inlined_call_operand.vmem [shape: f32[16,1], index: 2, kind: input, shape index: {}]
  %s3 = inlined_call_operand.vmem [shape: bf16[16,4,12], index: 3, kind: input, shape index: {}]
  %s4 = inlined_call_operand.vmem [shape: f32[1,12], index: 4, kind: input, shape index: {}]
  %s5 = inlined_call_operand.hbm [shape: f32[2,1,12], index: 5, kind: output, shape index: {}]
  %s6 = sld [smem:[#allocation0]]
  $region53: #{conv_model_forward.5} parent=0
    _
  %s8 = ssub.s32 1, %s6
  %s9 = scalar_select 0, %s8, %s6
  $region1: #{conv_model_forward.5} parent=0
    #allocation2 [shape = 'u8[1024]{0}', space=vmem, size = 0x400, scoped, tag = 'output window, operand 0']
    #allocation3 [shape = 's32[2]{0}', space=sflag, size = 0x8, scoped, tag = 'scoped memory for conv_model_forward.5']
    %10 = vsyncpa [#allocation3], 0
    %s11 = scalar_lea.sflag [#allocation3], 1
    %12 = vsyncpa %s11, 0
    loop: start=0, step=1, limit=4
    $region2: #{conv_model_forward.5} parent=1 // loop_pre_header
      _
    $region3: #{conv_model_forward.5} parent=1 // loop_header
      %s14 = sphi 0, %s18
      %p15 = scmp.ge.s32.totalorder %s14, 4
      %s24 = sphi 0, %s26
      %s27 = sphi 0, %s24
      %s28 = sphi 0, %s27
      %s44 = sphi 0, %s28
      %s48 = sphi 0, %s48
      %s50 = sphi 0, %s48
      %s51 = sphi 0, %s50
      %s65 = sphi 0, %s51
      %s69 = sphi 0, %s69
      %s71 = sphi 0, %s69
      %s72 = sphi 0, %s71
      %s86 = sphi 0, %s72
      %s90 = sphi 0, %s90
      %s92 = sphi 0, %s90
      %s93 = sphi 0, %s92
      %s107 = sphi 0, %s93
      %s111 = sphi 0, %s111
      %s113 = sphi 0, %s111
      %s114 = sphi 0, %s113
      %s128 = sphi 0, %s114
      %s134 = sphi 0, %s136
      %s137 = sphi 0, %s134
      %s138 = sphi 0, %s137
      %s154 = sphi 0, %s138
    $region4: #{conv_model_forward.5} parent=1 // loop_header_branch
      %17 = sbr.rel (%p15) target = $region8
    $region5: #{conv_model_forward.5} parent=1 // loop_body
      %s19 = ssub.s32 %s14, 1
      %s20 = ssub.s32 %s14, 2
      %s21 = sadd.s32 %s14, 1
      %s22 = ssub.s32 %s14, %s21
      %p23 = scmp.eq.s32.totalorder %s22, 0
      %s25 = sadd.s32 %s24, 1
      %s26 = scalar_select %p23, %s24, %s25
      %p29 = pneg %p23
      %p30 = scmp.eq.s32.totalorder %s14, 1
      %p31 = por %p29, %p30
      %p32 = scmp.ne.s32.totalorder %s24, %s27
      %p33 = scmp.eq.s32.totalorder %s14, 0
      %p34 = por %p32, %p33
      %p35 = scmp.ne.s32.totalorder %s24, %s27
      %p36 = scmp.eq.s32.totalorder %s19, 1
      %p37 = por %p35, %p36
      %p38 = scmp.ne.s32.totalorder %s27, %s28
      %p39 = scmp.eq.s32.totalorder %s19, 0
      %p40 = por %p38, %p39
      %p41 = scmp.ne.s32.totalorder %s27, %s28
      %p42 = scmp.eq.s32.totalorder %s20, 1
      %p43 = por %p41, %p42
      %p45 = scmp.ne.s32.totalorder %s28, %s44
      %p46 = scmp.eq.s32.totalorder %s20, 0
      %p47 = por %p45, %p46
      %s49 = sadd.s32 %s48, 1
      %p52 = scmp.eq.s32.totalorder %s14, 1
      %p53 = scmp.ne.s32.totalorder %s48, %s50
      %p54 = scmp.eq.s32.totalorder %s14, 0
      %p55 = por %p53, %p54
      %p56 = scmp.ne.s32.totalorder %s48, %s50
      %p57 = scmp.eq.s32.totalorder %s19, 1
      %p58 = por %p56, %p57
      %p59 = scmp.ne.s32.totalorder %s50, %s51
      %p60 = scmp.eq.s32.totalorder %s19, 0
      %p61 = por %p59, %p60
      %p62 = scmp.ne.s32.totalorder %s50, %s51
      %p63 = scmp.eq.s32.totalorder %s20, 1
      %p64 = por %p62, %p63
      %p66 = scmp.ne.s32.totalorder %s51, %s65
      %p67 = scmp.eq.s32.totalorder %s20, 0
      %p68 = por %p66, %p67
      %s70 = sadd.s32 %s69, 1
      %p73 = scmp.eq.s32.totalorder %s14, 1
      %p74 = scmp.ne.s32.totalorder %s69, %s71
      %p75 = scmp.eq.s32.totalorder %s14, 0
      %p76 = por %p74, %p75
      %p77 = scmp.ne.s32.totalorder %s69, %s71
      %p78 = scmp.eq.s32.totalorder %s19, 1
      %p79 = por %p77, %p78
      %p80 = scmp.ne.s32.totalorder %s71, %s72
      %p81 = scmp.eq.s32.totalorder %s19, 0
      %p82 = por %p80, %p81
      %p83 = scmp.ne.s32.totalorder %s71, %s72
      %p84 = scmp.eq.s32.totalorder %s20, 1
      %p85 = por %p83, %p84
      %p87 = scmp.ne.s32.totalorder %s72, %s86
      %p88 = scmp.eq.s32.totalorder %s20, 0
      %p89 = por %p87, %p88
      %s91 = sadd.s32 %s90, 1
      %p94 = scmp.eq.s32.totalorder %s14, 1
      %p95 = scmp.ne.s32.totalorder %s90, %s92
      %p96 = scmp.eq.s32.totalorder %s14, 0
      %p97 = por %p95, %p96
      %p98 = scmp.ne.s32.totalorder %s90, %s92
      %p99 = scmp.eq.s32.totalorder %s19, 1
      %p100 = por %p98, %p99
      %p101 = scmp.ne.s32.totalorder %s92, %s93
      %p102 = scmp.eq.s32.totalorder %s19, 0
      %p103 = por %p101, %p102
      %p104 = scmp.ne.s32.totalorder %s92, %s93
      %p105 = scmp.eq.s32.totalorder %s20, 1
      %p106 = por %p104, %p105
      %p108 = scmp.ne.s32.totalorder %s93, %s107
      %p109 = scmp.eq.s32.totalorder %s20, 0
      %p110 = por %p108, %p109
      %s112 = sadd.s32 %s111, 1
      %p115 = scmp.eq.s32.totalorder %s14, 1
      %p116 = scmp.ne.s32.totalorder %s111, %s113
      %p117 = scmp.eq.s32.totalorder %s14, 0
      %p118 = por %p116, %p117
      %p119 = scmp.ne.s32.totalorder %s111, %s113
      %p120 = scmp.eq.s32.totalorder %s19, 1
      %p121 = por %p119, %p120
      %p122 = scmp.ne.s32.totalorder %s113, %s114
      %p123 = scmp.eq.s32.totalorder %s19, 0
      %p124 = por %p122, %p123
      %p125 = scmp.ne.s32.totalorder %s113, %s114
      %p126 = scmp.eq.s32.totalorder %s20, 1
      %p127 = por %p125, %p126
      %p129 = scmp.ne.s32.totalorder %s114, %s128
      %p130 = scmp.eq.s32.totalorder %s20, 0
      %p131 = por %p129, %p130
      %s132 = ssub.s32 %s14, %s21
      %p133 = scmp.eq.s32.totalorder %s132, 0
      %s135 = sadd.s32 %s134, 1
      %s136 = scalar_select %p133, %s134, %s135
      %p139 = pneg %p133
      %p140 = scmp.eq.s32.totalorder %s14, 1
      %p141 = por %p139, %p140
      %p142 = scmp.ne.s32.totalorder %s134, %s137
      %p143 = scmp.eq.s32.totalorder %s14, 0
      %p144 = por %p142, %p143
      %p145 = scmp.ne.s32.totalorder %s134, %s137
      %p146 = scmp.eq.s32.totalorder %s19, 1
      %p147 = por %p145, %p146
      %p148 = scmp.ne.s32.totalorder %s137, %s138
      %p149 = scmp.eq.s32.totalorder %s19, 0
      %p150 = por %p148, %p149
      %p151 = scmp.ne.s32.totalorder %s137, %s138
      %p152 = scmp.eq.s32.totalorder %s20, 1
      %p153 = por %p151, %p152
      %p155 = scmp.ne.s32.totalorder %s138, %s154
      %p156 = scmp.eq.s32.totalorder %s20, 0
      %p157 = por %p155, %p156
      %p158 = scmp.le.s32.totalorder 1, %s14
      %p159 = scmp.lt.s32.totalorder %s14, 3
      %p160 = pnand %p158, %p159
      %p161 = pneg %p160
      // Predicated region
      $region9: #{conv_model_forward.5} parent=5 // pred_check
        _
      $region10: #{conv_model_forward.5} parent=5 // pred_check_branch
        %163 = sbr.rel (%p160) target = $region12
      $region11: #{conv_model_forward.5} parent=5 // pred_region
        %s164 = ssub.s32 %s14, 1
        // Predicated region
        $region13: #{conv_model_forward.5} parent=11 // pred_check
          %p165 = pneg %p61
        $region14: #{conv_model_forward.5} parent=11 // pred_check_branch
          %167 = sbr.rel (%p165) target = $region16
        $region15: #{conv_model_forward.5} parent=11 // pred_region
          _
        $region16: #{conv_model_forward.5} parent=11 // pred_fallthru
          _
        // Predicated region
        $region17: #{conv_model_forward.5} parent=11 // pred_check
          %p168 = pneg %p82
        $region18: #{conv_model_forward.5} parent=11 // pred_check_branch
          %170 = sbr.rel (%p168) target = $region20
        $region19: #{conv_model_forward.5} parent=11 // pred_region
          _
        $region20: #{conv_model_forward.5} parent=11 // pred_fallthru
          _
        // Predicated region
        $region21: #{conv_model_forward.5} parent=11 // pred_check
          %p171 = pneg %p103
        $region22: #{conv_model_forward.5} parent=11 // pred_check_branch
          %173 = sbr.rel (%p171) target = $region24
        $region23: #{conv_model_forward.5} parent=11 // pred_region
          _
        $region24: #{conv_model_forward.5} parent=11 // pred_fallthru
          _
        // Predicated region
        $region25: #{conv_model_forward.5} parent=11 // pred_check
          %p174 = pneg %p124
        $region26: #{conv_model_forward.5} parent=11 // pred_check_branch
          %176 = sbr.rel (%p174) target = $region28
        $region27: #{conv_model_forward.5} parent=11 // pred_region
          _
        $region28: #{conv_model_forward.5} parent=11 // pred_fallthru
          _
      $region12: #{conv_model_forward.5} parent=5 // pred_fallthru
        _
      %p177 = scmp.lt.s32.totalorder %s14, 2
      // Predicated region
      $region29: #{conv_model_forward.5} parent=5 // pred_check
        %p178 = pneg %p177
      $region30: #{conv_model_forward.5} parent=5 // pred_check_branch
        %180 = sbr.rel (%p178) target = $region32
      $region31: #{conv_model_forward.5} parent=5 // pred_region
        // Predicated region
        $region33: #{conv_model_forward.5} parent=31 // pred_check
          %p181 = pneg %p34
        $region34: #{conv_model_forward.5} parent=31 // pred_check_branch
          %183 = sbr.rel (%p181) target = $region36
        $region35: #{conv_model_forward.5} parent=31 // pred_region
          %p184 = scmp.lt.s32.totalorder %s14, 1
          %s185 = scalar_select %p184, %s14, 1
          %s186 = smul.addr %s185, 36
          %s187 = smul.addr %s186, 4
          %s188 = scalar_lea.vmem %s0, %s187
        $region36: #{conv_model_forward.5} parent=31 // pred_fallthru
          _
      $region32: #{conv_model_forward.5} parent=5 // pred_fallthru
        _
      %p189 = scmp.le.s32.totalorder 1, %s14
      %p190 = scmp.lt.s32.totalorder %s14, 3
      %p191 = pnand %p189, %p190
      %p192 = pneg %p191
      // Predicated region
      $region37: #{conv_model_forward.5} parent=5 // pred_check
        _
      $region38: #{conv_model_forward.5} parent=5 // pred_check_branch
        %194 = sbr.rel (%p191) target = $region40
      $region39: #{conv_model_forward.5} parent=5 // pred_region
        %s195 = ssub.s32 %s14, 1
        %p196 = scmp.lt.s32.totalorder %s19, 1
        %s197 = scalar_select %p196, %s19, 1
        %s198 = smul.addr %s197, 36
        %s199 = smul.addr %s198, 4
        %s200 = scalar_lea.vmem %s0, %s199
        %p201 = pneg %p40
        %p202 = pneg %p37
        %p203 = pneg %p61
        %p204 = pneg %p58
        %p205 = pneg %p82
        %p206 = pneg %p79
        %p207 = pneg %p103
        %p208 = pneg %p100
        %p209 = pneg %p124
        %p210 = pneg %p121
        %p211 = pneg %p150
        %p212 = pneg %p147
        %s213 = sand.u32 %s137, 1
        %s214 = scalar_lea.sflag [#allocation3], %s213
        %s215 = sand.u32 %s137, 1
        %s216 = scalar_lea.vmem [#allocation2], %s215
        %p217 = scmp.lt.s32.totalorder %s19, 1
        %s218 = scalar_select %p217, %s19, 1
        %s219 = smul.addr %s218, 36
        %s220 = smul.addr %s219, 4
        %s221 = scalar_lea.vmem %s0, %s220
        %v223 = vld [vmem:[%s1] sm:$0xff]
        %v224 = vld [vmem:[%s1 + $0x8] sm:$0xf]
        %v225 = vld [vmem:[%s1 + $0xc] sm:$0xff]
        %v226 = vld [vmem:[%s1 + $0x14] sm:$0xf]
        %v227 = vld [vmem:[%s221] sm:$0xf]
        %v228 = vld [vmem:[%s221 + $0x4] sm:$0xf]
        %v229 = vld [vmem:[%s221 + $0x8] sm:$0xf]
        %v230 = vld [vmem:[%s221 + $0xc] sm:$0xf]
        %v231 = vld [vmem:[%s221 + $0x10] sm:$0xf]
        %v232 = vld [vmem:[%s221 + $0x14] sm:$0xf]
        %v233 = vld [vmem:[%s221 + $0x18] sm:$0xf]
        %v234 = vld [vmem:[%s221 + $0x1c] sm:$0xf]
        %v235 = vld [vmem:[%s221 + $0x20] sm:$0xf]
        %v236 = vld [vmem:[%s221 + $0x24] sm:$0xf]
        %v237 = vld [vmem:[%s221 + $0x28] sm:$0xf]
        %v238 = vld [vmem:[%s221 + $0x2c] sm:$0xf]
        %v239 = vld [vmem:[%s221 + $0x30] sm:$0xf]
        %v240 = vld [vmem:[%s221 + $0x34] sm:$0xf]
        %v241 = vld [vmem:[%s221 + $0x38] sm:$0xf]
        %v242 = vld [vmem:[%s221 + $0x3c] sm:$0xf]
        %v243 = vld [vmem:[%s221 + $0x40] sm:$0xf]
        %v244 = vld [vmem:[%s221 + $0x44] sm:$0xf]
        %v245 = vld [vmem:[%s221 + $0x48] sm:$0xf]
        %v246 = vld [vmem:[%s221 + $0x4c] sm:$0xf]
        %v247 = vld [vmem:[%s221 + $0x50] sm:$0xf]
        %v248 = vld [vmem:[%s221 + $0x54] sm:$0xf]
        %v249 = vld [vmem:[%s221 + $0x58] sm:$0xf]
        %v250 = vld [vmem:[%s221 + $0x5c] sm:$0xf]
        %v251 = vld [vmem:[%s221 + $0x60] sm:$0xf]
        %v252 = vld [vmem:[%s221 + $0x64] sm:$0xf]
        %v253 = vld [vmem:[%s221 + $0x68] sm:$0xf]
        %v254 = vld [vmem:[%s221 + $0x6c] sm:$0xf]
        %v255 = vld [vmem:[%s221 + $0x70] sm:$0xf]
        %v256 = vld [vmem:[%s221 + $0x74] sm:$0xf]
        %v257 = vld [vmem:[%s221 + $0x78] sm:$0xf]
        %v258 = vld [vmem:[%s221 + $0x7c] sm:$0xf]
        %v259 = vld [vmem:[%s221 + $0x80] sm:$0xf]
        %v260 = vld [vmem:[%s221 + $0x84] sm:$0xf]
        %v261 = vld [vmem:[%s221 + $0x88] sm:$0xf]
        %v262 = vld [vmem:[%s221 + $0x8c] sm:$0xf]
        %v267 = vunpack.c.l.b16 %v223
        %v268 = vunpack.c.h.b16 %v223
        %v269 = vunpack.c.l.b16 %v224
        %v270 = vunpack.c.l.b16 %v225
        %v271 = vunpack.c.h.b16 %v225
        %v272 = vunpack.c.l.b16 %v226
        %v273 = vpack.c.b16 %v270, %v267
        %v274 = vpack.c.b16 %v271, %v268
        %v275 = vpack.c.b16 %v272, %v269
        %v314 = vunpack.c.l.b16 %v227
        %v315 = vunpack.c.l.b16 %v228
        %v316 = vunpack.c.l.b16 %v229
        %v317 = vunpack.c.l.b16 %v230
        %v318 = vunpack.c.l.b16 %v231
        %v319 = vunpack.c.l.b16 %v232
        %v320 = vunpack.c.l.b16 %v233
        %v321 = vunpack.c.l.b16 %v234
        %v322 = vunpack.c.l.b16 %v235
        %v323 = vunpack.c.l.b16 %v236
        %v324 = vunpack.c.l.b16 %v237
        %v325 = vunpack.c.l.b16 %v238
        %v326 = vunpack.c.l.b16 %v239
        %v327 = vunpack.c.l.b16 %v240
        %v328 = vunpack.c.l.b16 %v241
        %v329 = vunpack.c.l.b16 %v242
        %v330 = vunpack.c.l.b16 %v243
        %v331 = vunpack.c.l.b16 %v244
        %v332 = vunpack.c.l.b16 %v245
        %v333 = vunpack.c.l.b16 %v246
        %v334 = vunpack.c.l.b16 %v247
        %v335 = vunpack.c.l.b16 %v248
        %v336 = vunpack.c.l.b16 %v249
        %v337 = vunpack.c.l.b16 %v250
        %v338 = vunpack.c.l.b16 %v251
        %v339 = vunpack.c.l.b16 %v252
        %v340 = vunpack.c.l.b16 %v253
        %v341 = vunpack.c.l.b16 %v254
        %v342 = vunpack.c.l.b16 %v255
        %v343 = vunpack.c.l.b16 %v256
        %v344 = vunpack.c.l.b16 %v257
        %v345 = vunpack.c.l.b16 %v258
        %v346 = vunpack.c.l.b16 %v259
        %v347 = vunpack.c.l.b16 %v260
        %v348 = vunpack.c.l.b16 %v261
        %v349 = vunpack.c.l.b16 %v262
        %v350 = vpack.c.b16 %v315, %v314
        %v351 = vpack.c.b16 %v317, %v316
        %v352 = vpack.c.b16 %v319, %v318
        %v353 = vpack.c.b16 %v321, %v320
        %v354 = vpack.c.b16 %v323, %v322
        %v355 = vpack.c.b16 %v325, %v324
        %v356 = vpack.c.b16 %v327, %v326
        %v357 = vpack.c.b16 %v329, %v328
        %v358 = vpack.c.b16 %v331, %v330
        %v359 = vpack.c.b16 %v333, %v332
        %v360 = vpack.c.b16 %v335, %v334
        %v361 = vpack.c.b16 %v337, %v336
        %v362 = vpack.c.b16 %v339, %v338
        %v363 = vpack.c.b16 %v341, %v340
        %v364 = vpack.c.b16 %v343, %v342
        %v365 = vpack.c.b16 %v345, %v344
        %v366 = vpack.c.b16 %v347, %v346
        %v367 = vpack.c.b16 %v349, %v348
        %vm386 = vcmask 261120
        %v388 = vsel %vm386, %v275, 0
        %390 = vmatprep.subr.bf16.mxu0 0
        %391 = vmatpush1.bf16.msra.mxu0 %v350
        %392 = vmatprep.subr.bf16.mxu0 0
        %393 = vmatpush1.bf16.msra.mxu0 %v351
        %394 = vmatprep.subr.bf16.mxu0 0
        %395 = vmatpush1.bf16.msra.mxu0 %v352
        %396 = vmatprep.subr.bf16.mxu0 0
        %397 = vmatpush1.bf16.msra.mxu0 %v353
        %398 = vmatprep.subr.bf16.mxu0 0
        %399 = vmatpush1.bf16.msra.mxu0 %v354
        %400 = vmatprep.subr.bf16.mxu0 0
        %401 = vmatpush1.bf16.msra.mxu0 %v355
        %402 = vmatprep.subr.bf16.mxu0 0
        %403 = vmatpush1.bf16.msra.mxu0 %v356
        %404 = vmatprep.subr.bf16.mxu0 0
        %405 = vmatpush1.bf16.msra.mxu0 %v357
        %406 = vmatprep.subr.bf16.mxu0 0
        %407 = vmatpush1.bf16.msra.mxu0 %v358
        %408 = vmatprep.subr.bf16.mxu0 0
        %409 = vmatpush1.bf16.msra.mxu0 %v359
        %410 = vmatprep.subr.bf16.mxu0 0
        %411 = vmatpush1.bf16.msra.mxu0 %v360
        %412 = vmatprep.subr.bf16.mxu0 0
        %413 = vmatpush1.bf16.msra.mxu0 %v361
        %414 = vmatprep.subr.bf16.mxu0 0
        %415 = vmatpush1.bf16.msra.mxu0 %v362
        %416 = vmatprep.subr.bf16.mxu0 0
        %417 = vmatpush1.bf16.msra.mxu0 %v363
        %418 = vmatprep.subr.bf16.mxu0 0
        %419 = vmatpush1.bf16.msra.mxu0 %v364
        %420 = vmatprep.subr.bf16.mxu0 0
        %421 = vmatpush1.bf16.msra.mxu0 %v365
        %422 = vmatprep.mubr.bf16.mxu0 %v274
        %423 = vmatmul.mubr.bf16.gmra.mrb[0].mxu0 %v273
        %v424 = vpop.f32.mrb[0].mxu0
        %v425 = vadd.f32 0.0, %v424
        %v426 = vpop.f32.mrb[0].mxu0
        %v427 = vpop.f32.mrb[0].mxu0
        %v428 = vadd.f32 0.0, %v427
        %v429 = vpop.f32.mrb[0].mxu0
        %430 = vdwg.mxu0
        %431 = vmatprep.subr.bf16.mxu0 0
        %432 = vmatpush1.bf16.msra.mxu0 %v366
        %433 = vmatprep.subr.bf16.mxu0 0
        %434 = vmatpush1.bf16.msra.mxu0 %v367
        %435 = vmatprep.subr.bf16.mxu0 0
        %436 = vmatpush1.bf16.msra.mxu0 0
        %437 = vmatprep.subr.bf16.mxu0 0
        %438 = vmatpush1.bf16.msra.mxu0 0
        %439 = vmatprep.subr.bf16.mxu0 0
        %440 = vmatpush1.bf16.msra.mxu0 0
        %441 = vmatprep.subr.bf16.mxu0 0
        %442 = vmatpush1.bf16.msra.mxu0 0
        %443 = vmatprep.subr.bf16.mxu0 0
        %444 = vmatpush1.bf16.msra.mxu0 0
        %445 = vmatprep.subr.bf16.mxu0 0
        %446 = vmatpush1.bf16.msra.mxu0 0
        %447 = vmatprep.subr.bf16.mxu0 0
        %448 = vmatpush1.bf16.msra.mxu0 0
        %449 = vmatprep.subr.bf16.mxu0 0
        %450 = vmatpush1.bf16.msra.mxu0 0
        %451 = vmatprep.subr.bf16.mxu0 0
        %452 = vmatpush1.bf16.msra.mxu0 0
        %453 = vmatprep.subr.bf16.mxu0 0
        %454 = vmatpush1.bf16.msra.mxu0 0
        %455 = vmatprep.subr.bf16.mxu0 0
        %456 = vmatpush1.bf16.msra.mxu0 0
        %457 = vmatprep.subr.bf16.mxu0 0
        %458 = vmatpush1.bf16.msra.mxu0 0
        %459 = vmatprep.subr.bf16.mxu0 0
        %460 = vmatpush1.bf16.msra.mxu0 0
        %461 = vmatprep.subr.bf16.mxu0 0
        %462 = vmatpush1.bf16.msra.mxu0 0
        %463 = vmatprep.mubr.bf16.mxu0 0
        %464 = vmatmul.mubr.bf16.gmra.mrb[0].mxu0 %v388
        %v465 = vpop.f32.mrb[0].mxu0
        %v466 = vadd.f32 %v425, %v465
        %v467 = vpop.f32.mrb[0].mxu0
        %v468 = vpop.f32.mrb[0].mxu0
        %v469 = vadd.f32 %v428, %v468
        %v470 = vpop.f32.mrb[0].mxu0
        %471 = vdwg.mxu0
        %474 = vrot.lane.b32.xlu0 %v466, 124
        %v475 = vpop.permute.xlu0 %474
        %476 = vrot.lane.b32.xlu0 %v469, 124
        %v477 = vpop.permute.xlu0 %476
        %v480 = vmax.f32 %v466, %v475
        %v481 = vmax.f32 %v469, %v477
        %484 = vrot.lane.b32.xlu0 %v480, 120
        %v485 = vpop.permute.xlu0 %484
        %486 = vrot.lane.b32.xlu0 %v481, 120
        %v487 = vpop.permute.xlu0 %486
        %v490 = vmax.f32 %v480, %v485
        %v491 = vmax.f32 %v481, %v487
        %v492 = vld [vmem:[%s2] sm:$0xff]
        %v493 = vld [vmem:[%s2 + $0x8] sm:$0xff]
        %495 = vset.pattern.permute.xlu0 0
        %496 = vperm.xlu0 %495, %v492
        %v497 = vpop.permute.xlu0 %496
        %500 = vset.pattern.permute.xlu0 0
        %501 = vperm.xlu0 %500, %v493
        %v502 = vpop.permute.xlu0 %501
        %v504 = vadd.f32 %v490, %v497
        %v505 = vadd.f32 %v491, %v502
        %v506 = vmax.f32 %v504, 0.0
        %v507 = vmax.f32 %v505, 0.0
        %v508 = vpack.c.bf16 %v507, %v506
        %v509 = vld [vmem:[%s3] sm:$0x3]
        %v510 = vld [vmem:[%s3 + $0x2] sm:$0x3]
        %v511 = vld [vmem:[%s3 + $0x4] sm:$0x3]
        %v512 = vld [vmem:[%s3 + $0x6] sm:$0x3]
        %v513 = vld [vmem:[%s3 + $0x8] sm:$0x3]
        %v514 = vld [vmem:[%s3 + $0xa] sm:$0x3]
        %v515 = vld [vmem:[%s3 + $0xc] sm:$0x3]
        %v516 = vld [vmem:[%s3 + $0xe] sm:$0x3]
        %v517 = vld [vmem:[%s3 + $0x10] sm:$0x3]
        %v518 = vld [vmem:[%s3 + $0x12] sm:$0x3]
        %v519 = vld [vmem:[%s3 + $0x14] sm:$0x3]
        %v520 = vld [vmem:[%s3 + $0x16] sm:$0x3]
        %v521 = vld [vmem:[%s3 + $0x18] sm:$0x3]
        %v522 = vld [vmem:[%s3 + $0x1a] sm:$0x3]
        %v523 = vld [vmem:[%s3 + $0x1c] sm:$0x3]
        %v524 = vld [vmem:[%s3 + $0x1e] sm:$0x3]
        %v525 = vld [vmem:[%s4] sm:$0x1]
        %vm526 = vcmask 31744
        %v528 = vsel %vm526, %v508, 0
        %vm530 = vcmask 1041408
        %v532 = vsel %vm530, %v509, 0
        %534 = vmatprep.subr.bf16.mxu0 0
        %535 = vmatpush1.bf16.msra.mxu0 %v532
        %536 = vmatprep.subr.bf16.mxu0 0
        %537 = vmatpush1.bf16.msra.mxu0 0
        %538 = vmatprep.subr.bf16.mxu0 0
        %539 = vmatpush1.bf16.msra.mxu0 0
        %540 = vmatprep.subr.bf16.mxu0 0
        %541 = vmatpush1.bf16.msra.mxu0 0
        %542 = vmatprep.subr.bf16.mxu0 0
        %543 = vmatpush1.bf16.msra.mxu0 0
        %544 = vmatprep.subr.bf16.mxu0 0
        %545 = vmatpush1.bf16.msra.mxu0 0
        %546 = vmatprep.subr.bf16.mxu0 0
        %547 = vmatpush1.bf16.msra.mxu0 0
        %548 = vmatprep.subr.bf16.mxu0 0
        %549 = vmatpush1.bf16.msra.mxu0 0
        %550 = vmatprep.subr.bf16.mxu0 0
        %551 = vmatpush1.bf16.msra.mxu0 0
        %552 = vmatprep.subr.bf16.mxu0 0
        %553 = vmatpush1.bf16.msra.mxu0 0
        %554 = vmatprep.subr.bf16.mxu0 0
        %555 = vmatpush1.bf16.msra.mxu0 0
        %556 = vmatprep.subr.bf16.mxu0 0
        %557 = vmatpush1.bf16.msra.mxu0 0
        %558 = vmatprep.subr.bf16.mxu0 0
        %559 = vmatpush1.bf16.msra.mxu0 0
        %560 = vmatprep.subr.bf16.mxu0 0
        %561 = vmatpush1.bf16.msra.mxu0 0
        %562 = vmatprep.subr.bf16.mxu0 0
        %563 = vmatpush1.bf16.msra.mxu0 0
        %564 = vmatprep.subr.bf16.mxu0 0
        %565 = vmatpush1.bf16.msra.mxu0 0
        %566 = vmatprep.mubr.bf16.mxu0 0
        %567 = vmatmul.mubr.bf16.gmra.mrb[0].mxu0 %v528
        %v568 = vpop.f32.mrb[0].mxu0
        %v569 = vadd.f32 0.0, %v568
        %v570 = vpop.f32.mrb[0].mxu0
        %v571 = vpop.f32.mrb[0].mxu0
        %v572 = vpop.f32.mrb[0].mxu0
        %573 = vdwg.mxu0
        %v574 = vadd.f32 %v525, %v569
        %v575 = vshrl.u32 %v508, 16
        %v578 = vsel %vm526, %v575, 0
        %v581 = vsel %vm530, %v510, 0
        %583 = vmatprep.subr.bf16.mxu0 0
        %584 = vmatpush1.bf16.msra.mxu0 %v581
        %585 = vmatprep.subr.bf16.mxu0 0
        %586 = vmatpush1.bf16.msra.mxu0 0
        %587 = vmatprep.subr.bf16.mxu0 0
        %588 = vmatpush1.bf16.msra.mxu0 0
        %589 = vmatprep.subr.bf16.mxu0 0
        %590 = vmatpush1.bf16.msra.mxu0 0
        %591 = vmatprep.subr.bf16.mxu0 0
        %592 = vmatpush1.bf16.msra.mxu0 0
        %593 = vmatprep.subr.bf16.mxu0 0
        %594 = vmatpush1.bf16.msra.mxu0 0
        %595 = vmatprep.subr.bf16.mxu0 0
        %596 = vmatpush1.bf16.msra.mxu0 0
        %597 = vmatprep.subr.bf16.mxu0 0
        %598 = vmatpush1.bf16.msra.mxu0 0
        %599 = vmatprep.subr.bf16.mxu0 0
        %600 = vmatpush1.bf16.msra.mxu0 0
        %601 = vmatprep.subr.bf16.mxu0 0
        %602 = vmatpush1.bf16.msra.mxu0 0
        %603 = vmatprep.subr.bf16.mxu0 0
        %604 = vmatpush1.bf16.msra.mxu0 0
        %605 = vmatprep.subr.bf16.mxu0 0
        %606 = vmatpush1.bf16.msra.mxu0 0
        %607 = vmatprep.subr.bf16.mxu0 0
        %608 = vmatpush1.bf16.msra.mxu0 0
        %609 = vmatprep.subr.bf16.mxu0 0
        %610 = vmatpush1.bf16.msra.mxu0 0
        %611 = vmatprep.subr.bf16.mxu0 0
        %612 = vmatpush1.bf16.msra.mxu0 0
        %613 = vmatprep.subr.bf16.mxu0 0
        %614 = vmatpush1.bf16.msra.mxu0 0
        %615 = vmatprep.mubr.bf16.mxu0 0
        %616 = vmatmul.mubr.bf16.gmra.mrb[0].mxu0 %v578
        %v617 = vpop.f32.mrb[0].mxu0
        %v618 = vadd.f32 0.0, %v617
        %v619 = vpop.f32.mrb[0].mxu0
        %v620 = vpop.f32.mrb[0].mxu0
        %v621 = vpop.f32.mrb[0].mxu0
        %622 = vdwg.mxu0
        %v623 = vadd.f32 %v574, %v618
        %v625 = vrot.slane %v508, 1
        %v627 = vsel %vm526, %v625, 0
        %v630 = vsel %vm530, %v511, 0
        %632 = vmatprep.subr.bf16.mxu0 0
        %633 = vmatpush1.bf16.msra.mxu0 %v630
        %634 = vmatprep.subr.bf16.mxu0 0
        %635 = vmatpush1.bf16.msra.mxu0 0
        %636 = vmatprep.subr.bf16.mxu0 0
        %637 = vmatpush1.bf16.msra.mxu0 0
        %638 = vmatprep.subr.bf16.mxu0 0
        %639 = vmatpush1.bf16.msra.mxu0 0
        %640 = vmatprep.subr.bf16.mxu0 0
        %641 = vmatpush1.bf16.msra.mxu0 0
        %642 = vmatprep.subr.bf16.mxu0 0
        %643 = vmatpush1.bf16.msra.mxu0 0
        %644 = vmatprep.subr.bf16.mxu0 0
        %645 = vmatpush1.bf16.msra.mxu0 0
        %646 = vmatprep.subr.bf16.mxu0 0
        %647 = vmatpush1.bf16.msra.mxu0 0
        %648 = vmatprep.subr.bf16.mxu0 0
        %649 = vmatpush1.bf16.msra.mxu0 0
        %650 = vmatprep.subr.bf16.mxu0 0
        %651 = vmatpush1.bf16.msra.mxu0 0
        %652 = vmatprep.subr.bf16.mxu0 0
        %653 = vmatpush1.bf16.msra.mxu0 0
        %654 = vmatprep.subr.bf16.mxu0 0
        %655 = vmatpush1.bf16.msra.mxu0 0
        %656 = vmatprep.subr.bf16.mxu0 0
        %657 = vmatpush1.bf16.msra.mxu0 0
        %658 = vmatprep.subr.bf16.mxu0 0
        %659 = vmatpush1.bf16.msra.mxu0 0
        %660 = vmatprep.subr.bf16.mxu0 0
        %661 = vmatpush1.bf16.msra.mxu0 0
        %662 = vmatprep.subr.bf16.mxu0 0
        %663 = vmatpush1.bf16.msra.mxu0 0
        %664 = vmatprep.mubr.bf16.mxu0 0
        %665 = vmatmul.mubr.bf16.gmra.mrb[0].mxu0 %v627
        %v666 = vpop.f32.mrb[0].mxu0
        %v667 = vadd.f32 0.0, %v666
        %v668 = vpop.f32.mrb[0].mxu0
        %v669 = vpop.f32.mrb[0].mxu0
        %v670 = vpop.f32.mrb[0].mxu0
        %671 = vdwg.mxu0
        %v672 = vadd.f32 %v623, %v667
        %v673 = vrot.slane %v575, 1
        %v675 = vsel %vm526, %v673, 0
        %v678 = vsel %vm530, %v512, 0
        %680 = vmatprep.subr.bf16.mxu0 0
        %681 = vmatpush1.bf16.msra.mxu0 %v678
        %682 = vmatprep.subr.bf16.mxu0 0
        %683 = vmatpush1.bf16.msra.mxu0 0
        %684 = vmatprep.subr.bf16.mxu0 0
        %685 = vmatpush1.bf16.msra.mxu0 0
        %686 = vmatprep.subr.bf16.mxu0 0
        %687 = vmatpush1.bf16.msra.mxu0 0
        %688 = vmatprep.subr.bf16.mxu0 0
        %689 = vmatpush1.bf16.msra.mxu0 0
        %690 = vmatprep.subr.bf16.mxu0 0
        %691 = vmatpush1.bf16.msra.mxu0 0
        %692 = vmatprep.subr.bf16.mxu0 0
        %693 = vmatpush1.bf16.msra.mxu0 0
        %694 = vmatprep.subr.bf16.mxu0 0
        %695 = vmatpush1.bf16.msra.mxu0 0
        %696 = vmatprep.subr.bf16.mxu0 0
        %697 = vmatpush1.bf16.msra.mxu0 0
        %698 = vmatprep.subr.bf16.mxu0 0
        %699 = vmatpush1.bf16.msra.mxu0 0
        %700 = vmatprep.subr.bf16.mxu0 0
        %701 = vmatpush1.bf16.msra.mxu0 0
        %702 = vmatprep.subr.bf16.mxu0 0
        %703 = vmatpush1.bf16.msra.mxu0 0
        %704 = vmatprep.subr.bf16.mxu0 0
        %705 = vmatpush1.bf16.msra.mxu0 0
        %706 = vmatprep.subr.bf16.mxu0 0
        %707 = vmatpush1.bf16.msra.mxu0 0
        %708 = vmatprep.subr.bf16.mxu0 0
        %709 = vmatpush1.bf16.msra.mxu0 0
        %710 = vmatprep.subr.bf16.mxu0 0
        %711 = vmatpush1.bf16.msra.mxu0 0
        %712 = vmatprep.mubr.bf16.mxu0 0
        %713 = vmatmul.mubr.bf16.gmra.mrb[0].mxu0 %v675
        %v714 = vpop.f32.mrb[0].mxu0
        %v715 = vadd.f32 0.0, %v714
        %v716 = vpop.f32.mrb[0].mxu0
        %v717 = vpop.f32.mrb[0].mxu0
        %v718 = vpop.f32.mrb[0].mxu0
        %719 = vdwg.mxu0
        %v720 = vadd.f32 %v672, %v715
        %v721 = vrot.slane %v508, 2
        %v723 = vsel %vm526, %v721, 0
        %v726 = vsel %vm530, %v513, 0
        %728 = vmatprep.subr.bf16.mxu0 0
        %729 = vmatpush1.bf16.msra.mxu0 %v726
        %730 = vmatprep.subr.bf16.mxu0 0
        %731 = vmatpush1.bf16.msra.mxu0 0
        %732 = vmatprep.subr.bf16.mxu0 0
        %733 = vmatpush1.bf16.msra.mxu0 0
        %734 = vmatprep.subr.bf16.mxu0 0
        %735 = vmatpush1.bf16.msra.mxu0 0
        %736 = vmatprep.subr.bf16.mxu0 0
        %737 = vmatpush1.bf16.msra.mxu0 0
        %738 = vmatprep.subr.bf16.mxu0 0
        %739 = vmatpush1.bf16.msra.mxu0 0
        %740 = vmatprep.subr.bf16.mxu0 0
        %741 = vmatpush1.bf16.msra.mxu0 0
        %742 = vmatprep.subr.bf16.mxu0 0
        %743 = vmatpush1.bf16.msra.mxu0 0
        %744 = vmatprep.subr.bf16.mxu0 0
        %745 = vmatpush1.bf16.msra.mxu0 0
        %746 = vmatprep.subr.bf16.mxu0 0
        %747 = vmatpush1.bf16.msra.mxu0 0
        %748 = vmatprep.subr.bf16.mxu0 0
        %749 = vmatpush1.bf16.msra.mxu0 0
        %750 = vmatprep.subr.bf16.mxu0 0
        %751 = vmatpush1.bf16.msra.mxu0 0
        %752 = vmatprep.subr.bf16.mxu0 0
        %753 = vmatpush1.bf16.msra.mxu0 0
        %754 = vmatprep.subr.bf16.mxu0 0
        %755 = vmatpush1.bf16.msra.mxu0 0
        %756 = vmatprep.subr.bf16.mxu0 0
        %757 = vmatpush1.bf16.msra.mxu0 0
        %758 = vmatprep.subr.bf16.mxu0 0
        %759 = vmatpush1.bf16.msra.mxu0 0
        %760 = vmatprep.mubr.bf16.mxu0 0
        %761 = vmatmul.mubr.bf16.gmra.mrb[0].mxu0 %v723
        %v762 = vpop.f32.mrb[0].mxu0
        %v763 = vadd.f32 0.0, %v762
        %v764 = vpop.f32.mrb[0].mxu0
        %v765 = vpop.f32.mrb[0].mxu0
        %v766 = vpop.f32.mrb[0].mxu0
        %767 = vdwg.mxu0
        %v768 = vadd.f32 %v720, %v763
        %v769 = vrot.slane %v575, 2
        %v771 = vsel %vm526, %v769, 0
        %v774 = vsel %vm530, %v514, 0
        %776 = vmatprep.subr.bf16.mxu0 0
        %777 = vmatpush1.bf16.msra.mxu0 %v774
        %778 = vmatprep.subr.bf16.mxu0 0
        %779 = vmatpush1.bf16.msra.mxu0 0
        %780 = vmatprep.subr.bf16.mxu0 0
        %781 = vmatpush1.bf16.msra.mxu0 0
        %782 = vmatprep.subr.bf16.mxu0 0
        %783 = vmatpush1.bf16.msra.mxu0 0
        %784 = vmatprep.subr.bf16.mxu0 0
        %785 = vmatpush1.bf16.msra.mxu0 0
        %786 = vmatprep.subr.bf16.mxu0 0
        %787 = vmatpush1.bf16.msra.mxu0 0
        %788 = vmatprep.subr.bf16.mxu0 0
        %789 = vmatpush1.bf16.msra.mxu0 0
        %790 = vmatprep.subr.bf16.mxu0 0
        %791 = vmatpush1.bf16.msra.mxu0 0
        %792 = vmatprep.subr.bf16.mxu0 0
        %793 = vmatpush1.bf16.msra.mxu0 0
        %794 = vmatprep.subr.bf16.mxu0 0
        %795 = vmatpush1.bf16.msra.mxu0 0
        %796 = vmatprep.subr.bf16.mxu0 0
        %797 = vmatpush1.bf16.msra.mxu0 0
        %798 = vmatprep.subr.bf16.mxu0 0
        %799 = vmatpush1.bf16.msra.mxu0 0
        %800 = vmatprep.subr.bf16.mxu0 0
        %801 = vmatpush1.bf16.msra.mxu0 0
        %802 = vmatprep.subr.bf16.mxu0 0
        %803 = vmatpush1.bf16.msra.mxu0 0
        %804 = vmatprep.subr.bf16.mxu0 0
        %805 = vmatpush1.bf16.msra.mxu0 0
        %806 = vmatprep.subr.bf16.mxu0 0
        %807 = vmatpush1.bf16.msra.mxu0 0
        %808 = vmatprep.mubr.bf16.mxu0 0
        %809 = vmatmul.mubr.bf16.gmra.mrb[0].mxu0 %v771
        %v810 = vpop.f32.mrb[0].mxu0
        %v811 = vadd.f32 0.0, %v810
        %v812 = vpop.f32.mrb[0].mxu0
        %v813 = vpop.f32.mrb[0].mxu0
        %v814 = vpop.f32.mrb[0].mxu0
        %815 = vdwg.mxu0
        %v816 = vadd.f32 %v768, %v811
        %v817 = vrot.slane %v508, 3
        %v819 = vsel %vm526, %v817, 0
        %v822 = vsel %vm530, %v515, 0
        %824 = vmatprep.subr.bf16.mxu0 0
        %825 = vmatpush1.bf16.msra.mxu0 %v822
        %826 = vmatprep.subr.bf16.mxu0 0
        %827 = vmatpush1.bf16.msra.mxu0 0
        %828 = vmatprep.subr.bf16.mxu0 0
        %829 = vmatpush1.bf16.msra.mxu0 0
        %830 = vmatprep.subr.bf16.mxu0 0
        %831 = vmatpush1.bf16.msra.mxu0 0
        %832 = vmatprep.subr.bf16.mxu0 0
        %833 = vmatpush1.bf16.msra.mxu0 0
        %834 = vmatprep.subr.bf16.mxu0 0
        %835 = vmatpush1.bf16.msra.mxu0 0
        %836 = vmatprep.subr.bf16.mxu0 0
        %837 = vmatpush1.bf16.msra.mxu0 0
        %838 = vmatprep.subr.bf16.mxu0 0
        %839 = vmatpush1.bf16.msra.mxu0 0
        %840 = vmatprep.subr.bf16.mxu0 0
        %841 = vmatpush1.bf16.msra.mxu0 0
        %842 = vmatprep.subr.bf16.mxu0 0
        %843 = vmatpush1.bf16.msra.mxu0 0
        %844 = vmatprep.subr.bf16.mxu0 0
        %845 = vmatpush1.bf16.msra.mxu0 0
        %846 = vmatprep.subr.bf16.mxu0 0
        %847 = vmatpush1.bf16.msra.mxu0 0
        %848 = vmatprep.subr.bf16.mxu0 0
        %849 = vmatpush1.bf16.msra.mxu0 0
        %850 = vmatprep.subr.bf16.mxu0 0
        %851 = vmatpush1.bf16.msra.mxu0 0
        %852 = vmatprep.subr.bf16.mxu0 0
        %853 = vmatpush1.bf16.msra.mxu0 0
        %854 = vmatprep.subr.bf16.mxu0 0
        %855 = vmatpush1.bf16.msra.mxu0 0
        %856 = vmatprep.mubr.bf16.mxu0 0
        %857 = vmatmul.mubr.bf16.gmra.mrb[0].mxu0 %v819
        %v858 = vpop.f32.mrb[0].mxu0
        %v859 = vadd.f32 0.0, %v858
        %v860 = vpop.f32.mrb[0].mxu0
        %v861 = vpop.f32.mrb[0].mxu0
        %v862 = vpop.f32.mrb[0].mxu0
        %863 = vdwg.mxu0
        %v864 = vadd.f32 %v816, %v859
        %v865 = vrot.slane %v575, 3
        %v867 = vsel %vm526, %v865, 0
        %v870 = vsel %vm530, %v516, 0
        %872 = vmatprep.subr.bf16.mxu0 0
        %873 = vmatpush1.bf16.msra.mxu0 %v870
        %874 = vmatprep.subr.bf16.mxu0 0
        %875 = vmatpush1.bf16.msra.mxu0 0
        %876 = vmatprep.subr.bf16.mxu0 0
        %877 = vmatpush1.bf16.msra.mxu0 0
        %878 = vmatprep.subr.bf16.mxu0 0
        %879 = vmatpush1.bf16.msra.mxu0 0
        %880 = vmatprep.subr.bf16.mxu0 0
        %881 = vmatpush1.bf16.msra.mxu0 0
        %882 = vmatprep.subr.bf16.mxu0 0
        %883 = vmatpush1.bf16.msra.mxu0 0
        %884 = vmatprep.subr.bf16.mxu0 0
        %885 = vmatpush1.bf16.msra.mxu0 0
        %886 = vmatprep.subr.bf16.mxu0 0
        %887 = vmatpush1.bf16.msra.mxu0 0
        %888 = vmatprep.subr.bf16.mxu0 0
        %889 = vmatpush1.bf16.msra.mxu0 0
        %890 = vmatprep.subr.bf16.mxu0 0
        %891 = vmatpush1.bf16.msra.mxu0 0
        %892 = vmatprep.subr.bf16.mxu0 0
        %893 = vmatpush1.bf16.msra.mxu0 0
        %894 = vmatprep.subr.bf16.mxu0 0
        %895 = vmatpush1.bf16.msra.mxu0 0
        %896 = vmatprep.subr.bf16.mxu0 0
        %897 = vmatpush1.bf16.msra.mxu0 0
        %898 = vmatprep.subr.bf16.mxu0 0
        %899 = vmatpush1.bf16.msra.mxu0 0
        %900 = vmatprep.subr.bf16.mxu0 0
        %901 = vmatpush1.bf16.msra.mxu0 0
        %902 = vmatprep.subr.bf16.mxu0 0
        %903 = vmatpush1.bf16.msra.mxu0 0
        %904 = vmatprep.mubr.bf16.mxu0 0
        %905 = vmatmul.mubr.bf16.gmra.mrb[0].mxu0 %v867
        %v906 = vpop.f32.mrb[0].mxu0
        %v907 = vadd.f32 0.0, %v906
        %v908 = vpop.f32.mrb[0].mxu0
        %v909 = vpop.f32.mrb[0].mxu0
        %v910 = vpop.f32.mrb[0].mxu0
        %911 = vdwg.mxu0
        %v912 = vadd.f32 %v864, %v907
        %v913 = vrot.slane %v508, 4
        %v915 = vsel %vm526, %v913, 0
        %v918 = vsel %vm530, %v517, 0
        %920 = vmatprep.subr.bf16.mxu0 0
        %921 = vmatpush1.bf16.msra.mxu0 %v918
        %922 = vmatprep.subr.bf16.mxu0 0
        %923 = vmatpush1.bf16.msra.mxu0 0
        %924 = vmatprep.subr.bf16.mxu0 0
        %925 = vmatpush1.bf16.msra.mxu0 0
        %926 = vmatprep.subr.bf16.mxu0 0
        %927 = vmatpush1.bf16.msra.mxu0 0
        %928 = vmatprep.subr.bf16.mxu0 0
        %929 = vmatpush1.bf16.msra.mxu0 0
        %930 = vmatprep.subr.bf16.mxu0 0
        %931 = vmatpush1.bf16.msra.mxu0 0
        %932 = vmatprep.subr.bf16.mxu0 0
        %933 = vmatpush1.bf16.msra.mxu0 0
        %934 = vmatprep.subr.bf16.mxu0 0
        %935 = vmatpush1.bf16.msra.mxu0 0
        %936 = vmatprep.subr.bf16.mxu0 0
        %937 = vmatpush1.bf16.msra.mxu0 0
        %938 = vmatprep.subr.bf16.mxu0 0
        %939 = vmatpush1.bf16.msra.mxu0 0
        %940 = vmatprep.subr.bf16.mxu0 0
        %941 = vmatpush1.bf16.msra.mxu0 0
        %942 = vmatprep.subr.bf16.mxu0 0
        %943 = vmatpush1.bf16.msra.mxu0 0
        %944 = vmatprep.subr.bf16.mxu0 0
        %945 = vmatpush1.bf16.msra.mxu0 0
        %946 = vmatprep.subr.bf16.mxu0 0
        %947 = vmatpush1.bf16.msra.mxu0 0
        %948 = vmatprep.subr.bf16.mxu0 0
        %949 = vmatpush1.bf16.msra.mxu0 0
        %950 = vmatprep.subr.bf16.mxu0 0
        %951 = vmatpush1.bf16.msra.mxu0 0
        %952 = vmatprep.mubr.bf16.mxu0 0
        %953 = vmatmul.mubr.bf16.gmra.mrb[0].mxu0 %v915
        %v954 = vpop.f32.mrb[0].mxu0
        %v955 = vadd.f32 0.0, %v954
        %v956 = vpop.f32.mrb[0].mxu0
        %v957 = vpop.f32.mrb[0].mxu0
        %v958 = vpop.f32.mrb[0].mxu0
        %959 = vdwg.mxu0
        %v960 = vadd.f32 %v912, %v955
        %v961 = vrot.slane %v575, 4
        %v963 = vsel %vm526, %v961, 0
        %v966 = vsel %vm530, %v518, 0
        %968 = vmatprep.subr.bf16.mxu0 0
        %969 = vmatpush1.bf16.msra.mxu0 %v966
        %970 = vmatprep.subr.bf16.mxu0 0
        %971 = vmatpush1.bf16.msra.mxu0 0
        %972 = vmatprep.subr.bf16.mxu0 0
        %973 = vmatpush1.bf16.msra.mxu0 0
        %974 = vmatprep.subr.bf16.mxu0 0
        %975 = vmatpush1.bf16.msra.mxu0 0
        %976 = vmatprep.subr.bf16.mxu0 0
        %977 = vmatpush1.bf16.msra.mxu0 0
        %978 = vmatprep.subr.bf16.mxu0 0
        %979 = vmatpush1.bf16.msra.mxu0 0
        %980 = vmatprep.subr.bf16.mxu0 0
        %981 = vmatpush1.bf16.msra.mxu0 0
        %982 = vmatprep.subr.bf16.mxu0 0
        %983 = vmatpush1.bf16.msra.mxu0 0
        %984 = vmatprep.subr.bf16.mxu0 0
        %985 = vmatpush1.bf16.msra.mxu0 0
        %986 = vmatprep.subr.bf16.mxu0 0
        %987 = vmatpush1.bf16.msra.mxu0 0
        %988 = vmatprep.subr.bf16.mxu0 0
        %989 = vmatpush1.bf16.msra.mxu0 0
        %990 = vmatprep.subr.bf16.mxu0 0
        %991 = vmatpush1.bf16.msra.mxu0 0
        %992 = vmatprep.subr.bf16.mxu0 0
        %993 = vmatpush1.bf16.msra.mxu0 0
        %994 = vmatprep.subr.bf16.mxu0 0
        %995 = vmatpush1.bf16.msra.mxu0 0
        %996 = vmatprep.subr.bf16.mxu0 0
        %997 = vmatpush1.bf16.msra.mxu0 0
        %998 = vmatprep.subr.bf16.mxu0 0
        %999 = vmatpush1.bf16.msra.mxu0 0
        %1000 = vmatprep.mubr.bf16.mxu0 0
        %1001 = vmatmul.mubr.bf16.gmra.mrb[0].mxu0 %v963
        %v1002 = vpop.f32.mrb[0].mxu0
        %v1003 = vadd.f32 0.0, %v1002
        %v1004 = vpop.f32.mrb[0].mxu0
        %v1005 = vpop.f32.mrb[0].mxu0
        %v1006 = vpop.f32.mrb[0].mxu0
        %1007 = vdwg.mxu0
        %v1008 = vadd.f32 %v960, %v1003
        %v1009 = vrot.slane %v508, 5
        %v1011 = vsel %vm526, %v1009, 0
        %v1014 = vsel %vm530, %v519, 0
        %1016 = vmatprep.subr.bf16.mxu0 0
        %1017 = vmatpush1.bf16.msra.mxu0 %v1014
        %1018 = vmatprep.subr.bf16.mxu0 0
        %1019 = vmatpush1.bf16.msra.mxu0 0
        %1020 = vmatprep.subr.bf16.mxu0 0
        %1021 = vmatpush1.bf16.msra.mxu0 0
        %1022 = vmatprep.subr.bf16.mxu0 0
        %1023 = vmatpush1.bf16.msra.mxu0 0
        %1024 = vmatprep.subr.bf16.mxu0 0
        %1025 = vmatpush1.bf16.msra.mxu0 0
        %1026 = vmatprep.subr.bf16.mxu0 0
        %1027 = vmatpush1.bf16.msra.mxu0 0
        %1028 = vmatprep.subr.bf16.mxu0 0
        %1029 = vmatpush1.bf16.msra.mxu0 0
        %1030 = vmatprep.subr.bf16.mxu0 0
        %1031 = vmatpush1.bf16.msra.mxu0 0
        %1032 = vmatprep.subr.bf16.mxu0 0
        %1033 = vmatpush1.bf16.msra.mxu0 0
        %1034 = vmatprep.subr.bf16.mxu0 0
        %1035 = vmatpush1.bf16.msra.mxu0 0
        %1036 = vmatprep.subr.bf16.mxu0 0
        %1037 = vmatpush1.bf16.msra.mxu0 0
        %1038 = vmatprep.subr.bf16.mxu0 0
        %1039 = vmatpush1.bf16.msra.mxu0 0
        %1040 = vmatprep.subr.bf16.mxu0 0
        %1041 = vmatpush1.bf16.msra.mxu0 0
        %1042 = vmatprep.subr.bf16.mxu0 0
        %1043 = vmatpush1.bf16.msra.mxu0 0
        %1044 = vmatprep.subr.bf16.mxu0 0
        %1045 = vmatpush1.bf16.msra.mxu0 0
        %1046 = vmatprep.subr.bf16.mxu0 0
        %1047 = vmatpush1.bf16.msra.mxu0 0
        %1048 = vmatprep.mubr.bf16.mxu0 0
        %1049 = vmatmul.mubr.bf16.gmra.mrb[0].mxu0 %v1011
        %v1050 = vpop.f32.mrb[0].mxu0
        %v1051 = vadd.f32 0.0, %v1050
        %v1052 = vpop.f32.mrb[0].mxu0
        %v1053 = vpop.f32.mrb[0].mxu0
        %v1054 = vpop.f32.mrb[0].mxu0
        %1055 = vdwg.mxu0
        %v1056 = vadd.f32 %v1008, %v1051
        %v1057 = vrot.slane %v575, 5
        %v1059 = vsel %vm526, %v1057, 0
        %v1062 = vsel %vm530, %v520, 0
        %1064 = vmatprep.subr.bf16.mxu0 0
        %1065 = vmatpush1.bf16.msra.mxu0 %v1062
        %1066 = vmatprep.subr.bf16.mxu0 0
        %1067 = vmatpush1.bf16.msra.mxu0 0
        %1068 = vmatprep.subr.bf16.mxu0 0
        %1069 = vmatpush1.bf16.msra.mxu0 0
        %1070 = vmatprep.subr.bf16.mxu0 0
        %1071 = vmatpush1.bf16.msra.mxu0 0
        %1072 = vmatprep.subr.bf16.mxu0 0
        %1073 = vmatpush1.bf16.msra.mxu0 0
        %1074 = vmatprep.subr.bf16.mxu0 0
        %1075 = vmatpush1.bf16.msra.mxu0 0
        %1076 = vmatprep.subr.bf16.mxu0 0
        %1077 = vmatpush1.bf16.msra.mxu0 0
        %1078 = vmatprep.subr.bf16.mxu0 0
        %1079 = vmatpush1.bf16.msra.mxu0 0
        %1080 = vmatprep.subr.bf16.mxu0 0
        %1081 = vmatpush1.bf16.msra.mxu0 0
        %1082 = vmatprep.subr.bf16.mxu0 0
        %1083 = vmatpush1.bf16.msra.mxu0 0
        %1084 = vmatprep.subr.bf16.mxu0 0
        %1085 = vmatpush1.bf16.msra.mxu0 0
        %1086 = vmatprep.subr.bf16.mxu0 0
        %1087 = vmatpush1.bf16.msra.mxu0 0
        %1088 = vmatprep.subr.bf16.mxu0 0
        %1089 = vmatpush1.bf16.msra.mxu0 0
        %1090 = vmatprep.subr.bf16.mxu0 0
        %1091 = vmatpush1.bf16.msra.mxu0 0
        %1092 = vmatprep.subr.bf16.mxu0 0
        %1093 = vmatpush1.bf16.msra.mxu0 0
        %1094 = vmatprep.subr.bf16.mxu0 0
        %1095 = vmatpush1.bf16.msra.mxu0 0
        %1096 = vmatprep.mubr.bf16.mxu0 0
        %1097 = vmatmul.mubr.bf16.gmra.mrb[0].mxu0 %v1059
        %v1098 = vpop.f32.mrb[0].mxu0
        %v1099 = vadd.f32 0.0, %v1098
        %v1100 = vpop.f32.mrb[0].mxu0
        %v1101 = vpop.f32.mrb[0].mxu0
        %v1102 = vpop.f32.mrb[0].mxu0
        %1103 = vdwg.mxu0
        %v1104 = vadd.f32 %v1056, %v1099
        %v1105 = vrot.slane %v508, 6
        %v1107 = vsel %vm526, %v1105, 0
        %v1110 = vsel %vm530, %v521, 0
        %1112 = vmatprep.subr.bf16.mxu0 0
        %1113 = vmatpush1.bf16.msra.mxu0 %v1110
        %1114 = vmatprep.subr.bf16.mxu0 0
        %1115 = vmatpush1.bf16.msra.mxu0 0
        %1116 = vmatprep.subr.bf16.mxu0 0
        %1117 = vmatpush1.bf16.msra.mxu0 0
        %1118 = vmatprep.subr.bf16.mxu0 0
        %1119 = vmatpush1.bf16.msra.mxu0 0
        %1120 = vmatprep.subr.bf16.mxu0 0
        %1121 = vmatpush1.bf16.msra.mxu0 0
        %1122 = vmatprep.subr.bf16.mxu0 0
        %1123 = vmatpush1.bf16.msra.mxu0 0
        %1124 = vmatprep.subr.bf16.mxu0 0
        %1125 = vmatpush1.bf16.msra.mxu0 0
        %1126 = vmatprep.subr.bf16.mxu0 0
        %1127 = vmatpush1.bf16.msra.mxu0 0
        %1128 = vmatprep.subr.bf16.mxu0 0
        %1129 = vmatpush1.bf16.msra.mxu0 0
        %1130 = vmatprep.subr.bf16.mxu0 0
        %1131 = vmatpush1.bf16.msra.mxu0 0
        %1132 = vmatprep.subr.bf16.mxu0 0
        %1133 = vmatpush1.bf16.msra.mxu0 0
        %1134 = vmatprep.subr.bf16.mxu0 0
        %1135 = vmatpush1.bf16.msra.mxu0 0
        %1136 = vmatprep.subr.bf16.mxu0 0
        %1137 = vmatpush1.bf16.msra.mxu0 0
        %1138 = vmatprep.subr.bf16.mxu0 0
        %1139 = vmatpush1.bf16.msra.mxu0 0
        %1140 = vmatprep.subr.bf16.mxu0 0
        %1141 = vmatpush1.bf16.msra.mxu0 0
        %1142 = vmatprep.subr.bf16.mxu0 0
        %1143 = vmatpush1.bf16.msra.mxu0 0
        %1144 = vmatprep.mubr.bf16.mxu0 0
        %1145 = vmatmul.mubr.bf16.gmra.mrb[0].mxu0 %v1107
        %v1146 = vpop.f32.mrb[0].mxu0
        %v1147 = vadd.f32 0.0, %v1146
        %v1148 = vpop.f32.mrb[0].mxu0
        %v1149 = vpop.f32.mrb[0].mxu0
        %v1150 = vpop.f32.mrb[0].mxu0
        %1151 = vdwg.mxu0
        %v1152 = vadd.f32 %v1104, %v1147
        %v1153 = vrot.slane %v575, 6
        %v1155 = vsel %vm526, %v1153, 0
        %v1158 = vsel %vm530, %v522, 0
        %1160 = vmatprep.subr.bf16.mxu0 0
        %1161 = vmatpush1.bf16.msra.mxu0 %v1158
        %1162 = vmatprep.subr.bf16.mxu0 0
        %1163 = vmatpush1.bf16.msra.mxu0 0
        %1164 = vmatprep.subr.bf16.mxu0 0
        %1165 = vmatpush1.bf16.msra.mxu0 0
        %1166 = vmatprep.subr.bf16.mxu0 0
        %1167 = vmatpush1.bf16.msra.mxu0 0
        %1168 = vmatprep.subr.bf16.mxu0 0
        %1169 = vmatpush1.bf16.msra.mxu0 0
        %1170 = vmatprep.subr.bf16.mxu0 0
        %1171 = vmatpush1.bf16.msra.mxu0 0
        %1172 = vmatprep.subr.bf16.mxu0 0
        %1173 = vmatpush1.bf16.msra.mxu0 0
        %1174 = vmatprep.subr.bf16.mxu0 0
        %1175 = vmatpush1.bf16.msra.mxu0 0
        %1176 = vmatprep.subr.bf16.mxu0 0
        %1177 = vmatpush1.bf16.msra.mxu0 0
        %1178 = vmatprep.subr.bf16.mxu0 0
        %1179 = vmatpush1.bf16.msra.mxu0 0
        %1180 = vmatprep.subr.bf16.mxu0 0
        %1181 = vmatpush1.bf16.msra.mxu0 0
        %1182 = vmatprep.subr.bf16.mxu0 0
        %1183 = vmatpush1.bf16.msra.mxu0 0
        %1184 = vmatprep.subr.bf16.mxu0 0
        %1185 = vmatpush1.bf16.msra.mxu0 0
        %1186 = vmatprep.subr.bf16.mxu0 0
        %1187 = vmatpush1.bf16.msra.mxu0 0
        %1188 = vmatprep.subr.bf16.mxu0 0
        %1189 = vmatpush1.bf16.msra.mxu0 0
        %1190 = vmatprep.subr.bf16.mxu0 0
        %1191 = vmatpush1.bf16.msra.mxu0 0
        %1192 = vmatprep.mubr.bf16.mxu0 0
        %1193 = vmatmul.mubr.bf16.gmra.mrb[0].mxu0 %v1155
        %v1194 = vpop.f32.mrb[0].mxu0
        %v1195 = vadd.f32 0.0, %v1194
        %v1196 = vpop.f32.mrb[0].mxu0
        %v1197 = vpop.f32.mrb[0].mxu0
        %v1198 = vpop.f32.mrb[0].mxu0
        %1199 = vdwg.mxu0
        %v1200 = vadd.f32 %v1152, %v1195
        %v1201 = vrot.slane %v508, 7
        %v1203 = vsel %vm526, %v1201, 0
        %v1206 = vsel %vm530, %v523, 0
        %1208 = vmatprep.subr.bf16.mxu0 0
        %1209 = vmatpush1.bf16.msra.mxu0 %v1206
        %1210 = vmatprep.subr.bf16.mxu0 0
        %1211 = vmatpush1.bf16.msra.mxu0 0
        %1212 = vmatprep.subr.bf16.mxu0 0
        %1213 = vmatpush1.bf16.msra.mxu0 0
        %1214 = vmatprep.subr.bf16.mxu0 0
        %1215 = vmatpush1.bf16.msra.mxu0 0
        %1216 = vmatprep.subr.bf16.mxu0 0
        %1217 = vmatpush1.bf16.msra.mxu0 0
        %1218 = vmatprep.subr.bf16.mxu0 0
        %1219 = vmatpush1.bf16.msra.mxu0 0
        %1220 = vmatprep.subr.bf16.mxu0 0
        %1221 = vmatpush1.bf16.msra.mxu0 0
        %1222 = vmatprep.subr.bf16.mxu0 0
        %1223 = vmatpush1.bf16.msra.mxu0 0
        %1224 = vmatprep.subr.bf16.mxu0 0
        %1225 = vmatpush1.bf16.msra.mxu0 0
        %1226 = vmatprep.subr.bf16.mxu0 0
        %1227 = vmatpush1.bf16.msra.mxu0 0
        %1228 = vmatprep.subr.bf16.mxu0 0
        %1229 = vmatpush1.bf16.msra.mxu0 0
        %1230 = vmatprep.subr.bf16.mxu0 0
        %1231 = vmatpush1.bf16.msra.mxu0 0
        %1232 = vmatprep.subr.bf16.mxu0 0
        %1233 = vmatpush1.bf16.msra.mxu0 0
        %1234 = vmatprep.subr.bf16.mxu0 0
        %1235 = vmatpush1.bf16.msra.mxu0 0
        %1236 = vmatprep.subr.bf16.mxu0 0
        %1237 = vmatpush1.bf16.msra.mxu0 0
        %1238 = vmatprep.subr.bf16.mxu0 0
        %1239 = vmatpush1.bf16.msra.mxu0 0
        %1240 = vmatprep.mubr.bf16.mxu0 0
        %1241 = vmatmul.mubr.bf16.gmra.mrb[0].mxu0 %v1203
        %v1242 = vpop.f32.mrb[0].mxu0
        %v1243 = vadd.f32 0.0, %v1242
        %v1244 = vpop.f32.mrb[0].mxu0
        %v1245 = vpop.f32.mrb[0].mxu0
        %v1246 = vpop.f32.mrb[0].mxu0
        %1247 = vdwg.mxu0
        %v1248 = vadd.f32 %v1200, %v1243
        %v1249 = vrot.slane %v575, 7
        %v1251 = vsel %vm526, %v1249, 0
        %v1254 = vsel %vm530, %v524, 0
        %1256 = vmatprep.subr.bf16.mxu0 0
        %1257 = vmatpush1.bf16.msra.mxu0 %v1254
        %1258 = vmatprep.subr.bf16.mxu0 0
        %1259 = vmatpush1.bf16.msra.mxu0 0
        %1260 = vmatprep.subr.bf16.mxu0 0
        %1261 = vmatpush1.bf16.msra.mxu0 0
        %1262 = vmatprep.subr.bf16.mxu0 0
        %1263 = vmatpush1.bf16.msra.mxu0 0
        %1264 = vmatprep.subr.bf16.mxu0 0
        %1265 = vmatpush1.bf16.msra.mxu0 0
        %1266 = vmatprep.subr.bf16.mxu0 0
        %1267 = vmatpush1.bf16.msra.mxu0 0
        %1268 = vmatprep.subr.bf16.mxu0 0
        %1269 = vmatpush1.bf16.msra.mxu0 0
        %1270 = vmatprep.subr.bf16.mxu0 0
        %1271 = vmatpush1.bf16.msra.mxu0 0
        %1272 = vmatprep.subr.bf16.mxu0 0
        %1273 = vmatpush1.bf16.msra.mxu0 0
        %1274 = vmatprep.subr.bf16.mxu0 0
        %1275 = vmatpush1.bf16.msra.mxu0 0
        %1276 = vmatprep.subr.bf16.mxu0 0
        %1277 = vmatpush1.bf16.msra.mxu0 0
        %1278 = vmatprep.subr.bf16.mxu0 0
        %1279 = vmatpush1.bf16.msra.mxu0 0
        %1280 = vmatprep.subr.bf16.mxu0 0
        %1281 = vmatpush1.bf16.msra.mxu0 0
        %1282 = vmatprep.subr.bf16.mxu0 0
        %1283 = vmatpush1.bf16.msra.mxu0 0
        %1284 = vmatprep.subr.bf16.mxu0 0
        %1285 = vmatpush1.bf16.msra.mxu0 0
        %1286 = vmatprep.subr.bf16.mxu0 0
        %1287 = vmatpush1.bf16.msra.mxu0 0
        %1288 = vmatprep.mubr.bf16.mxu0 0
        %1289 = vmatmul.mubr.bf16.gmra.mrb[0].mxu0 %v1251
        %v1290 = vpop.f32.mrb[0].mxu0
        %v1291 = vadd.f32 0.0, %v1290
        %v1292 = vpop.f32.mrb[0].mxu0
        %v1293 = vpop.f32.mrb[0].mxu0
        %v1294 = vpop.f32.mrb[0].mxu0
        %1295 = vdwg.mxu0
        %v1296 = vadd.f32 %v1248, %v1291
        %vm1297 = vcmask 90112
        %1298 = vst.msk [vmem:[%s216] sm:$0x1] %vm1297, %v1296
        %s1299 = sand.u32 %s137, 1
        %s1300 = scalar_lea.sflag [#allocation3], %s1299
        %s1301 = sand.u32 %s137, 1
        %s1302 = scalar_lea.vmem [#allocation2], %s1301
        // Predicated region
        $region41: #{conv_model_forward.5} parent=39 // pred_check
          %p1303 = pneg %p147
        $region42: #{conv_model_forward.5} parent=39 // pred_check_branch
          %1305 = sbr.rel (%p1303) target = $region44
        $region43: #{conv_model_forward.5} parent=39 // pred_region
          %s1307 = ssub.s32 16, 16
          %1308 = vsyncadd %s1300, %s1307
          %s1309 = smul.addr %s19, 16
          %s1310 = scalar_lea.hbm %s5, %s1309
          %s1312 = sshll.u32 %s1302, 4
          %s1313 = int_to_ptr.vmem [resolvable:$true] %s1312
          %1315 = dma.vmem_to_hbm [thread:$0]  %s1313, 16, %s1310, %s1300
        $region44: #{conv_model_forward.5} parent=39 // pred_fallthru
          _
      $region40: #{conv_model_forward.5} parent=5 // pred_fallthru
        _
      %p1316 = scmp.le.s32.totalorder 2, %s14
      // Predicated region
      $region45: #{conv_model_forward.5} parent=5 // pred_check
        %p1317 = pneg %p1316
      $region46: #{conv_model_forward.5} parent=5 // pred_check_branch
        %1319 = sbr.rel (%p1317) target = $region48
      $region47: #{conv_model_forward.5} parent=5 // pred_region
        %s1320 = ssub.s32 %s14, 2
        // Predicated region
        $region49: #{conv_model_forward.5} parent=47 // pred_check
          %p1321 = pneg %p153
        $region50: #{conv_model_forward.5} parent=47 // pred_check_branch
          %1323 = sbr.rel (%p1321) target = $region52
        $region51: #{conv_model_forward.5} parent=47 // pred_region
          %s1324 = sand.u32 %s138, 1
          %s1325 = scalar_lea.sflag [#allocation3], %s1324
          %s1326 = sand.u32 %s138, 1
          %s1327 = scalar_lea.vmem [#allocation2], %s1326
          %1328 = dma.done %s1325, 16
        $region52: #{conv_model_forward.5} parent=47 // pred_fallthru
          _
      $region48: #{conv_model_forward.5} parent=5 // pred_fallthru
        _
    $region6: #{conv_model_forward.5} parent=1 // loop_footer
      %s18 = sadd.s32 1, %s14
    $region7: #{conv_model_forward.5} parent=1 // loop_footer_branch
      %13 = sbr.rel target = $region3
    $region8: #{conv_model_forward.5} parent=1 // loop_exit
      _
    %1329 = vsyncpa [#allocation3], 1
    %s1330 = scalar_lea.sflag [#allocation3], 1
    %1331 = vsyncpa %s1330, 1

</llo_original>
